<compile_context>
chip_gen: v5e
topology: v5e:2x2
jax: 0.10.0
libtpu: 0.0.40
codegen_flags: <defaults>
</compile_context>

<pallas_src>
import functools

import jax
import jax.numpy as jnp
from jax.experimental import pallas as pl
from jax.experimental.pallas import tpu as pltpu


# ----------------------------- fused Pallas kernel ----------------------------
def _fused_disc_kernel(x_ref, w1_ref, w2_ref, w3_ref, w4_ref,
                       b1_ref, b2_ref, b3_ref, b4_ref,
                       o_ref, h1_ref, h2_ref, h3_ref,
                       *, l1, l2, l3, alpha, eps):
    """Whole 4-layer discriminator for one batch element (channels-last).

    x_ref  : (L+2, C_in_pad)   zero-length-padded input, f32
    wN_ref : (4, C_in, C_out)  per-tap weights, bf16 (layer-4 C_out padded->128)
    bN_ref : (1, C_out)        biases, f32
    o_ref  : (L4_pad, 128)     layer-4 output (lane 0 = real channel), f32
    hN_ref : VMEM scratch holding layer-N activations with 1 zero-pad row
             on each side (layer 3 padded up so layer-4 reads stay in bounds).
    """

    def conv4(src_ref, w_ref, b_ref, l_out, stride):
        # Conv1d(kernel=4) as a sum of 4 shifted matmuls over the zero-padded
        # (length, channels) buffer: y[i] = sum_t src[stride*i + t] @ w[t].
        acc = None
        for t in range(4):
            if stride == 1:
                rows = src_ref[pl.ds(t, l_out), :]
            else:
                rows = src_ref[pl.ds(t, l_out, stride=stride), :]
            part = jnp.dot(rows.astype(jnp.bfloat16), w_ref[t],
                           preferred_element_type=jnp.float32)
            acc = part if acc is None else acc + part
        return acc + b_ref[...]

    def leaky(y):
        return jnp.where(y > 0, y, alpha * y)

    def inst_norm(y):
        # InstanceNorm1d (affine=False, biased variance) over length, one pass.
        inv_n = 1.0 / y.shape[0]
        s = jnp.sum(y, axis=0, keepdims=True)
        ss = jnp.sum(y * y, axis=0, keepdims=True)
        mean = s * inv_n
        var = ss * inv_n - mean * mean
        return (y - mean) * jax.lax.rsqrt(var + eps)

    # layer 1: Conv(C_in -> ndf, k4 s2 p1) + LeakyReLU
    y1 = leaky(conv4(x_ref, w1_ref, b1_ref, l1, 2))
    h1_ref[...] = jnp.zeros_like(h1_ref)
    h1_ref[1:1 + l1, :] = y1

    # layer 2: Conv(ndf -> 2ndf, k4 s2 p1) + InstanceNorm + LeakyReLU
    y2 = leaky(inst_norm(conv4(h1_ref, w2_ref, b2_ref, l2, 2)))
    h2_ref[...] = jnp.zeros_like(h2_ref)
    h2_ref[1:1 + l2, :] = y2

    # layer 3: Conv(2ndf -> 4ndf, k4 s2 p1) + InstanceNorm + LeakyReLU
    y3 = leaky(inst_norm(conv4(h2_ref, w3_ref, b3_ref, l3, 2)))
    h3_ref[...] = jnp.zeros_like(h3_ref)
    h3_ref[1:1 + l3, :] = y3

    # layer 4: Conv(4ndf -> 1, k4 s1 p1), no norm / activation.
    # C_out padded to 128 so the store is lane-dense; rows >= l3-1 are padding.
    l4p = o_ref.shape[0]
    o_ref[...] = conv4(h3_ref, w4_ref, b4_ref, l4p, 1).astype(o_ref.dtype)


# ------------------------------- JAX wrapper ----------------------------------
def _prep_weight(w, c_in_pad=None, c_out_pad=None):
    """PyTorch Conv1d weight (C_out, C_in, K) -> (K, C_in*, C_out*) in bf16."""
    wt = jnp.transpose(w, (2, 1, 0)).astype(jnp.float32)   # (K, C_in, C_out)
    _, ci, co = wt.shape
    if c_in_pad is not None and c_in_pad > ci:
        wt = jnp.pad(wt, ((0, 0), (0, c_in_pad - ci), (0, 0)))
    if c_out_pad is not None and c_out_pad > co:
        wt = jnp.pad(wt, ((0, 0), (0, 0), (0, c_out_pad - co)))
    return wt.astype(jnp.bfloat16)


def discriminator_forward(x, params):
    """x: (B, C_in, L) NCL with L % 8 == 0.  Returns (B, 1, L // 8 - 1)."""
    (w1, b1), (w2, b2), (w3, b3), (w4, b4) = params
    B, c_in, L = x.shape
    assert L % 8 == 0 and L >= 16, "sequence length must be a multiple of 8"
    c1, c2, c3 = w1.shape[0], w2.shape[0], w3.shape[0]
    l1, l2, l3 = L // 2, L // 4, L // 8
    l4 = l3 - 1
    l4p = max(8, ((l4 + 7) // 8) * 8)            # sublane-aligned output rows
    c_in_pad = ((c_in + 127) // 128) * 128       # lane-aligned contraction dim

    # channels-last + zero length-padding (conv padding=1) + channel zero-pad.
    x_cl = jnp.transpose(x, (0, 2, 1)).astype(jnp.float32)      # (B, L, C_in)
    x_cl = jnp.pad(x_cl, ((0, 0), (1, 1), (0, c_in_pad - c_in)))

    w1p = _prep_weight(w1, c_in_pad=c_in_pad)    # (4, c_in_pad, c1)
    w2p = _prep_weight(w2)                       # (4, c1, c2)
    w3p = _prep_weight(w3)                       # (4, c2, c3)
    w4p = _prep_weight(w4, c_out_pad=128)        # (4, c3, 128)

    b1r = b1.reshape(1, c1).astype(jnp.float32)
    b2r = b2.reshape(1, c2).astype(jnp.float32)
    b3r = b3.reshape(1, c3).astype(jnp.float32)
    b4r = jnp.pad(b4.reshape(1, 1).astype(jnp.float32), ((0, 0), (0, 127)))

    kern = functools.partial(_fused_disc_kernel, l1=l1, l2=l2, l3=l3,
                             alpha=0.2, eps=1e-5)

    out = pl.pallas_call(
        kern,
        out_shape=jax.ShapeDtypeStruct((B, l4p, 128), jnp.float32),
        grid=(B,),
        in_specs=[
            pl.BlockSpec((None, L + 2, c_in_pad), lambda b: (b, 0, 0)),
            pl.BlockSpec((4, c_in_pad, c1), lambda b: (0, 0, 0)),
            pl.BlockSpec((4, c1, c2), lambda b: (0, 0, 0)),
            pl.BlockSpec((4, c2, c3), lambda b: (0, 0, 0)),
            pl.BlockSpec((4, c3, 128), lambda b: (0, 0, 0)),
            pl.BlockSpec((1, c1), lambda b: (0, 0)),
            pl.BlockSpec((1, c2), lambda b: (0, 0)),
            pl.BlockSpec((1, c3), lambda b: (0, 0)),
            pl.BlockSpec((1, 128), lambda b: (0, 0)),
        ],
        out_specs=pl.BlockSpec((None, l4p, 128), lambda b: (b, 0, 0)),
        scratch_shapes=[
            pltpu.VMEM((l1 + 2, c1), jnp.float32),   # padded layer-1 acts
            pltpu.VMEM((l2 + 2, c2), jnp.float32),   # padded layer-2 acts
            pltpu.VMEM((l4p + 3, c3), jnp.float32),  # padded layer-3 acts
        ],
        compiler_params=pltpu.CompilerParams(
            dimension_semantics=("parallel",)),
    )(x_cl, w1p, w2p, w3p, w4p, b1r, b2r, b3r, b4r)

    # real output channel is lane 0; rows >= l4 are padding.
    return jnp.transpose(out[:, :l4, 0:1], (0, 2, 1))    # (B, 1, l4)


# ------------------------- pure-JAX reference ---------------------------------
def _conv1d_ref(x, w, b, stride, padding):
    out = jax.lax.conv_general_dilated(
        x, w, window_strides=(stride,), padding=[(padding, padding)],
        dimension_numbers=("NCH", "OIH", "NCH"))
    return out + b[None, :, None]


def _instnorm_ref(x, eps=1e-5):
    mean = jnp.mean(x, axis=2, keepdims=True)
    var = jnp.mean((x - mean) ** 2, axis=2, keepdims=True)
    return (x - mean) * jax.lax.rsqrt(var + eps)


def _leaky_ref(x):
    return jnp.where(x > 0, x, 0.2 * x)


def discriminator_ref(x, params):
    (w1, b1), (w2, b2), (w3, b3), (w4, b4) = params
    h = _leaky_ref(_conv1d_ref(x, w1, b1, 2, 1))
    h = _leaky_ref(_instnorm_ref(_conv1d_ref(h, w2, b2, 2, 1)))
    h = _leaky_ref(_instnorm_ref(_conv1d_ref(h, w3, b3, 2, 1)))
    return _conv1d_ref(h, w4, b4, 1, 1)


# ------------------------------ params ----------------------------------------
def init_params(key, input_channels=80, ndf=64):
    """Deterministic init mimicking PyTorch Conv1d default (uniform +/- 1/sqrt(fan_in))."""
    shapes = [
        (ndf, input_channels, 4),
        (ndf * 2, ndf, 4),
        (ndf * 4, ndf * 2, 4),
        (1, ndf * 4, 4),
    ]
    params = []
    for shp in shapes:
        key, kw, kb = jax.random.split(key, 3)
        fan_in = shp[1] * shp[2]
        bound = 1.0 / jnp.sqrt(float(fan_in))
        w = jax.random.uniform(kw, shp, jnp.float32, -bound, bound)
        b = jax.random.uniform(kb, (shp[0],), jnp.float32, -bound, bound)
        params.append((w, b))
    return params


# -------------------------------- main -----------------------------------------
if __name__ == "__main__":
    key = jax.random.PRNGKey(0)
    k_x, k_p = jax.random.split(key)

    B, C_IN, L = 2, 80, 64  # small but consistent with Conv1d(80, 64, ...)
    x = jax.random.normal(k_x, (B, C_IN, L), jnp.float32)
    params = init_params(k_p, input_channels=C_IN, ndf=64)

    out = jax.block_until_ready(jax.jit(discriminator_forward)(x, params))
    ref = jax.block_until_ready(jax.jit(discriminator_ref)(x, params))

    assert out.shape == (B, 1, L // 8 - 1), out.shape  # (2, 1, 7)
    # bf16 MXU operands vs f32 reference -> slightly relaxed tolerance.
    err = float(jnp.max(jnp.abs(out - ref)))
    assert jnp.allclose(out, ref, atol=3e-2, rtol=3e-2), err

    print("KERNEL_OK")
</pallas_src>

<mosaic_0001>
module attributes {stable_mosaic.version = 11 : i64} {
  func.func @_fused_disc_kernel(%arg0: i32, %arg1: memref<1x66x128xf32, #tpu.memory_space<vmem>>, %arg2: memref<4x128x64xbf16, #tpu.memory_space<vmem>>, %arg3: memref<4x64x128xbf16, #tpu.memory_space<vmem>>, %arg4: memref<4x128x256xbf16, #tpu.memory_space<vmem>>, %arg5: memref<4x256x128xbf16, #tpu.memory_space<vmem>>, %arg6: memref<1x64xf32, #tpu.memory_space<vmem>>, %arg7: memref<1x128xf32, #tpu.memory_space<vmem>>, %arg8: memref<1x256xf32, #tpu.memory_space<vmem>>, %arg9: memref<1x128xf32, #tpu.memory_space<vmem>>, %arg10: memref<1x8x128xf32, #tpu.memory_space<vmem>>, %arg11: memref<34x64xf32, #tpu.memory_space<vmem>>, %arg12: memref<18x128xf32, #tpu.memory_space<vmem>>, %arg13: memref<11x256xf32, #tpu.memory_space<vmem>>) attributes {dimension_semantics = [#tpu.dimension_semantics<parallel>], iteration_bounds = array<i64: 2>, scalar_prefetch = 0 : i64, scratch_operands = 3 : i64, tpu.core_type = #tpu.core_type<tc>, window_params = [{transform_indices = @transform_0, window_bounds = array<i64: 1, 66, 128>}, {pipeline_mode = #tpu.pipeline_mode<synchronous>, transform_indices = @transform_1, window_bounds = array<i64: 4, 128, 64>}, {pipeline_mode = #tpu.pipeline_mode<synchronous>, transform_indices = @transform_2, window_bounds = array<i64: 4, 64, 128>}, {pipeline_mode = #tpu.pipeline_mode<synchronous>, transform_indices = @transform_3, window_bounds = array<i64: 4, 128, 256>}, {pipeline_mode = #tpu.pipeline_mode<synchronous>, transform_indices = @transform_4, window_bounds = array<i64: 4, 256, 128>}, {pipeline_mode = #tpu.pipeline_mode<synchronous>, transform_indices = @transform_5, window_bounds = array<i64: 1, 64>}, {pipeline_mode = #tpu.pipeline_mode<synchronous>, transform_indices = @transform_6, window_bounds = array<i64: 1, 128>}, {pipeline_mode = #tpu.pipeline_mode<synchronous>, transform_indices = @transform_7, window_bounds = array<i64: 1, 256>}, {pipeline_mode = #tpu.pipeline_mode<synchronous>, transform_indices = @transform_8, window_bounds = array<i64: 1, 128>}, {transform_indices = @transform_9, window_bounds = array<i64: 1, 8, 128>}]} {
    %c0 = arith.constant 0 : index
    %c0_0 = arith.constant 0 : index
    %c0_1 = arith.constant 0 : index
    %0 = tpu.strided_load %arg1[%c0, %c0_0, %c0_1] {strides = array<i32: 1, 2, 1>} : memref<1x66x128xf32, #tpu.memory_space<vmem>>, vector<1x32x128xf32>
    %1 = vector.shape_cast %0 : vector<1x32x128xf32> to vector<32x128xf32>
    %2 = arith.truncf %1 : vector<32x128xf32> to vector<32x128xbf16>
    %c0_2 = arith.constant 0 : index
    %c0_3 = arith.constant 0 : index
    %c0_4 = arith.constant 0 : index
    %3 = vector.load %arg2[%c0_2, %c0_3, %c0_4] : memref<4x128x64xbf16, #tpu.memory_space<vmem>>, vector<1x128x64xbf16>
    %4 = vector.shape_cast %3 : vector<1x128x64xbf16> to vector<128x64xbf16>
    %cst = arith.constant dense<0.000000e+00> : vector<32x64xf32>
    %5 = tpu.matmul %2, %4, %cst {dimension_numbers = #tpu.dot_dimension_numbers<[1], [0], [0], [1], [0, 0, 1, 1], [], []>} : vector<32x128xbf16>, vector<128x64xbf16>, vector<32x64xf32> -> vector<32x64xf32>
    %c0_5 = arith.constant 0 : index
    %c1 = arith.constant 1 : index
    %c0_6 = arith.constant 0 : index
    %6 = tpu.strided_load %arg1[%c0_5, %c1, %c0_6] {strides = array<i32: 1, 2, 1>} : memref<1x66x128xf32, #tpu.memory_space<vmem>>, vector<1x32x128xf32>
    %7 = vector.shape_cast %6 : vector<1x32x128xf32> to vector<32x128xf32>
    %8 = arith.truncf %7 : vector<32x128xf32> to vector<32x128xbf16>
    %c1_7 = arith.constant 1 : index
    %c0_8 = arith.constant 0 : index
    %c0_9 = arith.constant 0 : index
    %9 = vector.load %arg2[%c1_7, %c0_8, %c0_9] : memref<4x128x64xbf16, #tpu.memory_space<vmem>>, vector<1x128x64xbf16>
    %10 = vector.shape_cast %9 : vector<1x128x64xbf16> to vector<128x64xbf16>
    %cst_10 = arith.constant dense<0.000000e+00> : vector<32x64xf32>
    %11 = tpu.matmul %8, %10, %cst_10 {dimension_numbers = #tpu.dot_dimension_numbers<[1], [0], [0], [1], [0, 0, 1, 1], [], []>} : vector<32x128xbf16>, vector<128x64xbf16>, vector<32x64xf32> -> vector<32x64xf32>
    %12 = arith.addf %5, %11 : vector<32x64xf32>
    %c0_11 = arith.constant 0 : index
    %c2 = arith.constant 2 : index
    %c0_12 = arith.constant 0 : index
    %13 = tpu.strided_load %arg1[%c0_11, %c2, %c0_12] {strides = array<i32: 1, 2, 1>} : memref<1x66x128xf32, #tpu.memory_space<vmem>>, vector<1x32x128xf32>
    %14 = vector.shape_cast %13 : vector<1x32x128xf32> to vector<32x128xf32>
    %15 = arith.truncf %14 : vector<32x128xf32> to vector<32x128xbf16>
    %c2_13 = arith.constant 2 : index
    %c0_14 = arith.constant 0 : index
    %c0_15 = arith.constant 0 : index
    %16 = vector.load %arg2[%c2_13, %c0_14, %c0_15] : memref<4x128x64xbf16, #tpu.memory_space<vmem>>, vector<1x128x64xbf16>
    %17 = vector.shape_cast %16 : vector<1x128x64xbf16> to vector<128x64xbf16>
    %cst_16 = arith.constant dense<0.000000e+00> : vector<32x64xf32>
    %18 = tpu.matmul %15, %17, %cst_16 {dimension_numbers = #tpu.dot_dimension_numbers<[1], [0], [0], [1], [0, 0, 1, 1], [], []>} : vector<32x128xbf16>, vector<128x64xbf16>, vector<32x64xf32> -> vector<32x64xf32>
    %19 = arith.addf %12, %18 : vector<32x64xf32>
    %c0_17 = arith.constant 0 : index
    %c3 = arith.constant 3 : index
    %c0_18 = arith.constant 0 : index
    %20 = tpu.strided_load %arg1[%c0_17, %c3, %c0_18] {strides = array<i32: 1, 2, 1>} : memref<1x66x128xf32, #tpu.memory_space<vmem>>, vector<1x32x128xf32>
    %21 = vector.shape_cast %20 : vector<1x32x128xf32> to vector<32x128xf32>
    %22 = arith.truncf %21 : vector<32x128xf32> to vector<32x128xbf16>
    %c3_19 = arith.constant 3 : index
    %c0_20 = arith.constant 0 : index
    %c0_21 = arith.constant 0 : index
    %23 = vector.load %arg2[%c3_19, %c0_20, %c0_21] : memref<4x128x64xbf16, #tpu.memory_space<vmem>>, vector<1x128x64xbf16>
    %24 = vector.shape_cast %23 : vector<1x128x64xbf16> to vector<128x64xbf16>
    %cst_22 = arith.constant dense<0.000000e+00> : vector<32x64xf32>
    %25 = tpu.matmul %22, %24, %cst_22 {dimension_numbers = #tpu.dot_dimension_numbers<[1], [0], [0], [1], [0, 0, 1, 1], [], []>} : vector<32x128xbf16>, vector<128x64xbf16>, vector<32x64xf32> -> vector<32x64xf32>
    %26 = arith.addf %19, %25 : vector<32x64xf32>
    %c0_23 = arith.constant 0 : index
    %c0_24 = arith.constant 0 : index
    %27 = vector.load %arg6[%c0_23, %c0_24] : memref<1x64xf32, #tpu.memory_space<vmem>>, vector<1x64xf32>
    %28 = vector.broadcast %27 : vector<1x64xf32> to vector<32x64xf32>
    %29 = arith.addf %26, %28 : vector<32x64xf32>
    %cst_25 = arith.constant 0.000000e+00 : f32
    %30 = vector.broadcast %cst_25 : f32 to vector<32x64xf32>
    %31 = arith.cmpf ogt, %29, %30 : vector<32x64xf32>
    %cst_26 = arith.constant 2.000000e-01 : f32
    %32 = vector.broadcast %cst_26 : f32 to vector<32x64xf32>
    %33 = arith.mulf %32, %29 : vector<32x64xf32>
    %34 = arith.select %31, %29, %33 : vector<32x64xi1>, vector<32x64xf32>
    %cst_27 = arith.constant 0.000000e+00 : f32
    %35 = vector.broadcast %cst_27 : f32 to vector<34x64xf32>
    %c0_28 = arith.constant 0 : index
    %c0_29 = arith.constant 0 : index
    %36 = vector.load %arg11[%c0_28, %c0_29] : memref<34x64xf32, #tpu.memory_space<vmem>>, vector<34x64xf32>
    tpu.vector_store %arg11[%c0_28, %c0_29], %35 {strides = array<i32>} : memref<34x64xf32, #tpu.memory_space<vmem>>, vector<34x64xf32>,
    %c1_30 = arith.constant 1 : index
    %c0_31 = arith.constant 0 : index
    %37 = vector.load %arg11[%c1_30, %c0_31] : memref<34x64xf32, #tpu.memory_space<vmem>>, vector<32x64xf32>
    tpu.vector_store %arg11[%c1_30, %c0_31], %34 {strides = array<i32>} : memref<34x64xf32, #tpu.memory_space<vmem>>, vector<32x64xf32>,
    %c0_32 = arith.constant 0 : index
    %c0_33 = arith.constant 0 : index
    %38 = tpu.strided_load %arg11[%c0_32, %c0_33] {strides = array<i32: 2, 1>} : memref<34x64xf32, #tpu.memory_space<vmem>>, vector<16x64xf32>
    %39 = arith.truncf %38 : vector<16x64xf32> to vector<16x64xbf16>
    %c0_34 = arith.constant 0 : index
    %c0_35 = arith.constant 0 : index
    %c0_36 = arith.constant 0 : index
    %40 = vector.load %arg3[%c0_34, %c0_35, %c0_36] : memref<4x64x128xbf16, #tpu.memory_space<vmem>>, vector<1x64x128xbf16>
    %41 = vector.shape_cast %40 : vector<1x64x128xbf16> to vector<64x128xbf16>
    %cst_37 = arith.constant dense<0.000000e+00> : vector<16x128xf32>
    %42 = tpu.matmul %39, %41, %cst_37 {dimension_numbers = #tpu.dot_dimension_numbers<[1], [0], [0], [1], [0, 0, 1, 1], [], []>} : vector<16x64xbf16>, vector<64x128xbf16>, vector<16x128xf32> -> vector<16x128xf32>
    %c1_38 = arith.constant 1 : index
    %c0_39 = arith.constant 0 : index
    %43 = tpu.strided_load %arg11[%c1_38, %c0_39] {strides = array<i32: 2, 1>} : memref<34x64xf32, #tpu.memory_space<vmem>>, vector<16x64xf32>
    %44 = arith.truncf %43 : vector<16x64xf32> to vector<16x64xbf16>
    %c1_40 = arith.constant 1 : index
    %c0_41 = arith.constant 0 : index
    %c0_42 = arith.constant 0 : index
    %45 = vector.load %arg3[%c1_40, %c0_41, %c0_42] : memref<4x64x128xbf16, #tpu.memory_space<vmem>>, vector<1x64x128xbf16>
    %46 = vector.shape_cast %45 : vector<1x64x128xbf16> to vector<64x128xbf16>
    %cst_43 = arith.constant dense<0.000000e+00> : vector<16x128xf32>
    %47 = tpu.matmul %44, %46, %cst_43 {dimension_numbers = #tpu.dot_dimension_numbers<[1], [0], [0], [1], [0, 0, 1, 1], [], []>} : vector<16x64xbf16>, vector<64x128xbf16>, vector<16x128xf32> -> vector<16x128xf32>
    %48 = arith.addf %42, %47 : vector<16x128xf32>
    %c2_44 = arith.constant 2 : index
    %c0_45 = arith.constant 0 : index
    %49 = tpu.strided_load %arg11[%c2_44, %c0_45] {strides = array<i32: 2, 1>} : memref<34x64xf32, #tpu.memory_space<vmem>>, vector<16x64xf32>
    %50 = arith.truncf %49 : vector<16x64xf32> to vector<16x64xbf16>
    %c2_46 = arith.constant 2 : index
    %c0_47 = arith.constant 0 : index
    %c0_48 = arith.constant 0 : index
    %51 = vector.load %arg3[%c2_46, %c0_47, %c0_48] : memref<4x64x128xbf16, #tpu.memory_space<vmem>>, vector<1x64x128xbf16>
    %52 = vector.shape_cast %51 : vector<1x64x128xbf16> to vector<64x128xbf16>
    %cst_49 = arith.constant dense<0.000000e+00> : vector<16x128xf32>
    %53 = tpu.matmul %50, %52, %cst_49 {dimension_numbers = #tpu.dot_dimension_numbers<[1], [0], [0], [1], [0, 0, 1, 1], [], []>} : vector<16x64xbf16>, vector<64x128xbf16>, vector<16x128xf32> -> vector<16x128xf32>
    %54 = arith.addf %48, %53 : vector<16x128xf32>
    %c3_50 = arith.constant 3 : index
    %c0_51 = arith.constant 0 : index
    %55 = tpu.strided_load %arg11[%c3_50, %c0_51] {strides = array<i32: 2, 1>} : memref<34x64xf32, #tpu.memory_space<vmem>>, vector<16x64xf32>
    %56 = arith.truncf %55 : vector<16x64xf32> to vector<16x64xbf16>
    %c3_52 = arith.constant 3 : index
    %c0_53 = arith.constant 0 : index
    %c0_54 = arith.constant 0 : index
    %57 = vector.load %arg3[%c3_52, %c0_53, %c0_54] : memref<4x64x128xbf16, #tpu.memory_space<vmem>>, vector<1x64x128xbf16>
    %58 = vector.shape_cast %57 : vector<1x64x128xbf16> to vector<64x128xbf16>
    %cst_55 = arith.constant dense<0.000000e+00> : vector<16x128xf32>
    %59 = tpu.matmul %56, %58, %cst_55 {dimension_numbers = #tpu.dot_dimension_numbers<[1], [0], [0], [1], [0, 0, 1, 1], [], []>} : vector<16x64xbf16>, vector<64x128xbf16>, vector<16x128xf32> -> vector<16x128xf32>
    %60 = arith.addf %54, %59 : vector<16x128xf32>
    %c0_56 = arith.constant 0 : index
    %c0_57 = arith.constant 0 : index
    %61 = vector.load %arg7[%c0_56, %c0_57] : memref<1x128xf32, #tpu.memory_space<vmem>>, vector<1x128xf32>
    %62 = vector.broadcast %61 : vector<1x128xf32> to vector<16x128xf32>
    %63 = arith.addf %60, %62 : vector<16x128xf32>
    %cst_58 = arith.constant dense<0.000000e+00> : vector<128xf32>
    %64 = vector.multi_reduction <add>, %63, %cst_58 [0] : vector<16x128xf32> to vector<128xf32>
    %65 = vector.shape_cast %64 : vector<128xf32> to vector<1x128xf32>
    %66 = arith.mulf %63, %63 : vector<16x128xf32>
    %cst_59 = arith.constant dense<0.000000e+00> : vector<128xf32>
    %67 = vector.multi_reduction <add>, %66, %cst_59 [0] : vector<16x128xf32> to vector<128xf32>
    %68 = vector.shape_cast %67 : vector<128xf32> to vector<1x128xf32>
    %cst_60 = arith.constant 6.250000e-02 : f32
    %69 = vector.broadcast %cst_60 : f32 to vector<1x128xf32>
    %70 = arith.mulf %65, %69 : vector<1x128xf32>
    %cst_61 = arith.constant 6.250000e-02 : f32
    %71 = vector.broadcast %cst_61 : f32 to vector<1x128xf32>
    %72 = arith.mulf %68, %71 : vector<1x128xf32>
    %73 = arith.mulf %70, %70 : vector<1x128xf32>
    %74 = arith.subf %72, %73 : vector<1x128xf32>
    %75 = vector.broadcast %70 : vector<1x128xf32> to vector<16x128xf32>
    %76 = arith.subf %63, %75 : vector<16x128xf32>
    %cst_62 = arith.constant 9.99999974E-6 : f32
    %77 = vector.broadcast %cst_62 : f32 to vector<1x128xf32>
    %78 = arith.addf %74, %77 : vector<1x128xf32>
    %79 = math.rsqrt %78 : vector<1x128xf32>
    %80 = vector.broadcast %79 : vector<1x128xf32> to vector<16x128xf32>
    %81 = arith.mulf %76, %80 : vector<16x128xf32>
    %cst_63 = arith.constant 0.000000e+00 : f32
    %82 = vector.broadcast %cst_63 : f32 to vector<16x128xf32>
    %83 = arith.cmpf ogt, %81, %82 : vector<16x128xf32>
    %cst_64 = arith.constant 2.000000e-01 : f32
    %84 = vector.broadcast %cst_64 : f32 to vector<16x128xf32>
    %85 = arith.mulf %84, %81 : vector<16x128xf32>
    %86 = arith.select %83, %81, %85 : vector<16x128xi1>, vector<16x128xf32>
    %cst_65 = arith.constant 0.000000e+00 : f32
    %87 = vector.broadcast %cst_65 : f32 to vector<18x128xf32>
    %c0_66 = arith.constant 0 : index
    %c0_67 = arith.constant 0 : index
    %88 = vector.load %arg12[%c0_66, %c0_67] : memref<18x128xf32, #tpu.memory_space<vmem>>, vector<18x128xf32>
    tpu.vector_store %arg12[%c0_66, %c0_67], %87 {strides = array<i32>} : memref<18x128xf32, #tpu.memory_space<vmem>>, vector<18x128xf32>,
    %c1_68 = arith.constant 1 : index
    %c0_69 = arith.constant 0 : index
    %89 = vector.load %arg12[%c1_68, %c0_69] : memref<18x128xf32, #tpu.memory_space<vmem>>, vector<16x128xf32>
    tpu.vector_store %arg12[%c1_68, %c0_69], %86 {strides = array<i32>} : memref<18x128xf32, #tpu.memory_space<vmem>>, vector<16x128xf32>,
    %c0_70 = arith.constant 0 : index
    %c0_71 = arith.constant 0 : index
    %90 = tpu.strided_load %arg12[%c0_70, %c0_71] {strides = array<i32: 2, 1>} : memref<18x128xf32, #tpu.memory_space<vmem>>, vector<8x128xf32>
    %91 = arith.truncf %90 : vector<8x128xf32> to vector<8x128xbf16>
    %c0_72 = arith.constant 0 : index
    %c0_73 = arith.constant 0 : index
    %c0_74 = arith.constant 0 : index
    %92 = vector.load %arg4[%c0_72, %c0_73, %c0_74] : memref<4x128x256xbf16, #tpu.memory_space<vmem>>, vector<1x128x256xbf16>
    %93 = vector.shape_cast %92 : vector<1x128x256xbf16> to vector<128x256xbf16>
    %cst_75 = arith.constant dense<0.000000e+00> : vector<8x256xf32>
    %94 = tpu.matmul %91, %93, %cst_75 {dimension_numbers = #tpu.dot_dimension_numbers<[1], [0], [0], [1], [0, 0, 1, 1], [], []>} : vector<8x128xbf16>, vector<128x256xbf16>, vector<8x256xf32> -> vector<8x256xf32>
    %c1_76 = arith.constant 1 : index
    %c0_77 = arith.constant 0 : index
    %95 = tpu.strided_load %arg12[%c1_76, %c0_77] {strides = array<i32: 2, 1>} : memref<18x128xf32, #tpu.memory_space<vmem>>, vector<8x128xf32>
    %96 = arith.truncf %95 : vector<8x128xf32> to vector<8x128xbf16>
    %c1_78 = arith.constant 1 : index
    %c0_79 = arith.constant 0 : index
    %c0_80 = arith.constant 0 : index
    %97 = vector.load %arg4[%c1_78, %c0_79, %c0_80] : memref<4x128x256xbf16, #tpu.memory_space<vmem>>, vector<1x128x256xbf16>
    %98 = vector.shape_cast %97 : vector<1x128x256xbf16> to vector<128x256xbf16>
    %cst_81 = arith.constant dense<0.000000e+00> : vector<8x256xf32>
    %99 = tpu.matmul %96, %98, %cst_81 {dimension_numbers = #tpu.dot_dimension_numbers<[1], [0], [0], [1], [0, 0, 1, 1], [], []>} : vector<8x128xbf16>, vector<128x256xbf16>, vector<8x256xf32> -> vector<8x256xf32>
    %100 = arith.addf %94, %99 : vector<8x256xf32>
    %c2_82 = arith.constant 2 : index
    %c0_83 = arith.constant 0 : index
    %101 = tpu.strided_load %arg12[%c2_82, %c0_83] {strides = array<i32: 2, 1>} : memref<18x128xf32, #tpu.memory_space<vmem>>, vector<8x128xf32>
    %102 = arith.truncf %101 : vector<8x128xf32> to vector<8x128xbf16>
    %c2_84 = arith.constant 2 : index
    %c0_85 = arith.constant 0 : index
    %c0_86 = arith.constant 0 : index
    %103 = vector.load %arg4[%c2_84, %c0_85, %c0_86] : memref<4x128x256xbf16, #tpu.memory_space<vmem>>, vector<1x128x256xbf16>
    %104 = vector.shape_cast %103 : vector<1x128x256xbf16> to vector<128x256xbf16>
    %cst_87 = arith.constant dense<0.000000e+00> : vector<8x256xf32>
    %105 = tpu.matmul %102, %104, %cst_87 {dimension_numbers = #tpu.dot_dimension_numbers<[1], [0], [0], [1], [0, 0, 1, 1], [], []>} : vector<8x128xbf16>, vector<128x256xbf16>, vector<8x256xf32> -> vector<8x256xf32>
    %106 = arith.addf %100, %105 : vector<8x256xf32>
    %c3_88 = arith.constant 3 : index
    %c0_89 = arith.constant 0 : index
    %107 = tpu.strided_load %arg12[%c3_88, %c0_89] {strides = array<i32: 2, 1>} : memref<18x128xf32, #tpu.memory_space<vmem>>, vector<8x128xf32>
    %108 = arith.truncf %107 : vector<8x128xf32> to vector<8x128xbf16>
    %c3_90 = arith.constant 3 : index
    %c0_91 = arith.constant 0 : index
    %c0_92 = arith.constant 0 : index
    %109 = vector.load %arg4[%c3_90, %c0_91, %c0_92] : memref<4x128x256xbf16, #tpu.memory_space<vmem>>, vector<1x128x256xbf16>
    %110 = vector.shape_cast %109 : vector<1x128x256xbf16> to vector<128x256xbf16>
    %cst_93 = arith.constant dense<0.000000e+00> : vector<8x256xf32>
    %111 = tpu.matmul %108, %110, %cst_93 {dimension_numbers = #tpu.dot_dimension_numbers<[1], [0], [0], [1], [0, 0, 1, 1], [], []>} : vector<8x128xbf16>, vector<128x256xbf16>, vector<8x256xf32> -> vector<8x256xf32>
    %112 = arith.addf %106, %111 : vector<8x256xf32>
    %c0_94 = arith.constant 0 : index
    %c0_95 = arith.constant 0 : index
    %113 = vector.load %arg8[%c0_94, %c0_95] : memref<1x256xf32, #tpu.memory_space<vmem>>, vector<1x256xf32>
    %114 = vector.broadcast %113 : vector<1x256xf32> to vector<8x256xf32>
    %115 = arith.addf %112, %114 : vector<8x256xf32>
    %cst_96 = arith.constant dense<0.000000e+00> : vector<256xf32>
    %116 = vector.multi_reduction <add>, %115, %cst_96 [0] : vector<8x256xf32> to vector<256xf32>
    %117 = vector.shape_cast %116 : vector<256xf32> to vector<1x256xf32>
    %118 = arith.mulf %115, %115 : vector<8x256xf32>
    %cst_97 = arith.constant dense<0.000000e+00> : vector<256xf32>
    %119 = vector.multi_reduction <add>, %118, %cst_97 [0] : vector<8x256xf32> to vector<256xf32>
    %120 = vector.shape_cast %119 : vector<256xf32> to vector<1x256xf32>
    %cst_98 = arith.constant 1.250000e-01 : f32
    %121 = vector.broadcast %cst_98 : f32 to vector<1x256xf32>
    %122 = arith.mulf %117, %121 : vector<1x256xf32>
    %cst_99 = arith.constant 1.250000e-01 : f32
    %123 = vector.broadcast %cst_99 : f32 to vector<1x256xf32>
    %124 = arith.mulf %120, %123 : vector<1x256xf32>
    %125 = arith.mulf %122, %122 : vector<1x256xf32>
    %126 = arith.subf %124, %125 : vector<1x256xf32>
    %127 = vector.broadcast %122 : vector<1x256xf32> to vector<8x256xf32>
    %128 = arith.subf %115, %127 : vector<8x256xf32>
    %cst_100 = arith.constant 9.99999974E-6 : f32
    %129 = vector.broadcast %cst_100 : f32 to vector<1x256xf32>
    %130 = arith.addf %126, %129 : vector<1x256xf32>
    %131 = math.rsqrt %130 : vector<1x256xf32>
    %132 = vector.broadcast %131 : vector<1x256xf32> to vector<8x256xf32>
    %133 = arith.mulf %128, %132 : vector<8x256xf32>
    %cst_101 = arith.constant 0.000000e+00 : f32
    %134 = vector.broadcast %cst_101 : f32 to vector<8x256xf32>
    %135 = arith.cmpf ogt, %133, %134 : vector<8x256xf32>
    %cst_102 = arith.constant 2.000000e-01 : f32
    %136 = vector.broadcast %cst_102 : f32 to vector<8x256xf32>
    %137 = arith.mulf %136, %133 : vector<8x256xf32>
    %138 = arith.select %135, %133, %137 : vector<8x256xi1>, vector<8x256xf32>
    %cst_103 = arith.constant 0.000000e+00 : f32
    %139 = vector.broadcast %cst_103 : f32 to vector<11x256xf32>
    %c0_104 = arith.constant 0 : index
    %c0_105 = arith.constant 0 : index
    %140 = vector.load %arg13[%c0_104, %c0_105] : memref<11x256xf32, #tpu.memory_space<vmem>>, vector<11x256xf32>
    tpu.vector_store %arg13[%c0_104, %c0_105], %139 {strides = array<i32>} : memref<11x256xf32, #tpu.memory_space<vmem>>, vector<11x256xf32>,
    %c1_106 = arith.constant 1 : index
    %c0_107 = arith.constant 0 : index
    %141 = vector.load %arg13[%c1_106, %c0_107] : memref<11x256xf32, #tpu.memory_space<vmem>>, vector<8x256xf32>
    tpu.vector_store %arg13[%c1_106, %c0_107], %138 {strides = array<i32>} : memref<11x256xf32, #tpu.memory_space<vmem>>, vector<8x256xf32>,
    %c0_108 = arith.constant 0 : index
    %c0_109 = arith.constant 0 : index
    %142 = vector.load %arg13[%c0_108, %c0_109] : memref<11x256xf32, #tpu.memory_space<vmem>>, vector<8x256xf32>
    %143 = arith.truncf %142 : vector<8x256xf32> to vector<8x256xbf16>
    %c0_110 = arith.constant 0 : index
    %c0_111 = arith.constant 0 : index
    %c0_112 = arith.constant 0 : index
    %144 = vector.load %arg5[%c0_110, %c0_111, %c0_112] : memref<4x256x128xbf16, #tpu.memory_space<vmem>>, vector<1x256x128xbf16>
    %145 = vector.shape_cast %144 : vector<1x256x128xbf16> to vector<256x128xbf16>
    %cst_113 = arith.constant dense<0.000000e+00> : vector<8x128xf32>
    %146 = tpu.matmul %143, %145, %cst_113 {dimension_numbers = #tpu.dot_dimension_numbers<[1], [0], [0], [1], [0, 0, 1, 1], [], []>} : vector<8x256xbf16>, vector<256x128xbf16>, vector<8x128xf32> -> vector<8x128xf32>
    %c1_114 = arith.constant 1 : index
    %c0_115 = arith.constant 0 : index
    %147 = vector.load %arg13[%c1_114, %c0_115] : memref<11x256xf32, #tpu.memory_space<vmem>>, vector<8x256xf32>
    %148 = arith.truncf %147 : vector<8x256xf32> to vector<8x256xbf16>
    %c1_116 = arith.constant 1 : index
    %c0_117 = arith.constant 0 : index
    %c0_118 = arith.constant 0 : index
    %149 = vector.load %arg5[%c1_116, %c0_117, %c0_118] : memref<4x256x128xbf16, #tpu.memory_space<vmem>>, vector<1x256x128xbf16>
    %150 = vector.shape_cast %149 : vector<1x256x128xbf16> to vector<256x128xbf16>
    %cst_119 = arith.constant dense<0.000000e+00> : vector<8x128xf32>
    %151 = tpu.matmul %148, %150, %cst_119 {dimension_numbers = #tpu.dot_dimension_numbers<[1], [0], [0], [1], [0, 0, 1, 1], [], []>} : vector<8x256xbf16>, vector<256x128xbf16>, vector<8x128xf32> -> vector<8x128xf32>
    %152 = arith.addf %146, %151 : vector<8x128xf32>
    %c2_120 = arith.constant 2 : index
    %c0_121 = arith.constant 0 : index
    %153 = vector.load %arg13[%c2_120, %c0_121] : memref<11x256xf32, #tpu.memory_space<vmem>>, vector<8x256xf32>
    %154 = arith.truncf %153 : vector<8x256xf32> to vector<8x256xbf16>
    %c2_122 = arith.constant 2 : index
    %c0_123 = arith.constant 0 : index
    %c0_124 = arith.constant 0 : index
    %155 = vector.load %arg5[%c2_122, %c0_123, %c0_124] : memref<4x256x128xbf16, #tpu.memory_space<vmem>>, vector<1x256x128xbf16>
    %156 = vector.shape_cast %155 : vector<1x256x128xbf16> to vector<256x128xbf16>
    %cst_125 = arith.constant dense<0.000000e+00> : vector<8x128xf32>
    %157 = tpu.matmul %154, %156, %cst_125 {dimension_numbers = #tpu.dot_dimension_numbers<[1], [0], [0], [1], [0, 0, 1, 1], [], []>} : vector<8x256xbf16>, vector<256x128xbf16>, vector<8x128xf32> -> vector<8x128xf32>
    %158 = arith.addf %152, %157 : vector<8x128xf32>
    %c3_126 = arith.constant 3 : index
    %c0_127 = arith.constant 0 : index
    %159 = vector.load %arg13[%c3_126, %c0_127] : memref<11x256xf32, #tpu.memory_space<vmem>>, vector<8x256xf32>
    %160 = arith.truncf %159 : vector<8x256xf32> to vector<8x256xbf16>
    %c3_128 = arith.constant 3 : index
    %c0_129 = arith.constant 0 : index
    %c0_130 = arith.constant 0 : index
    %161 = vector.load %arg5[%c3_128, %c0_129, %c0_130] : memref<4x256x128xbf16, #tpu.memory_space<vmem>>, vector<1x256x128xbf16>
    %162 = vector.shape_cast %161 : vector<1x256x128xbf16> to vector<256x128xbf16>
    %cst_131 = arith.constant dense<0.000000e+00> : vector<8x128xf32>
    %163 = tpu.matmul %160, %162, %cst_131 {dimension_numbers = #tpu.dot_dimension_numbers<[1], [0], [0], [1], [0, 0, 1, 1], [], []>} : vector<8x256xbf16>, vector<256x128xbf16>, vector<8x128xf32> -> vector<8x128xf32>
    %164 = arith.addf %158, %163 : vector<8x128xf32>
    %c0_132 = arith.constant 0 : index
    %c0_133 = arith.constant 0 : index
    %165 = vector.load %arg9[%c0_132, %c0_133] : memref<1x128xf32, #tpu.memory_space<vmem>>, vector<1x128xf32>
    %166 = vector.broadcast %165 : vector<1x128xf32> to vector<8x128xf32>
    %167 = arith.addf %164, %166 : vector<8x128xf32>
    %c0_134 = arith.constant 0 : index
    %c0_135 = arith.constant 0 : index
    %c0_136 = arith.constant 0 : index
    %168 = vector.load %arg10[%c0_134, %c0_135, %c0_136] : memref<1x8x128xf32, #tpu.memory_space<vmem>>, vector<1x8x128xf32>
    %169 = vector.shape_cast %168 : vector<1x8x128xf32> to vector<8x128xf32>
    %170 = vector.shape_cast %167 : vector<8x128xf32> to vector<1x8x128xf32>
    tpu.vector_store %arg10[%c0_134, %c0_135, %c0_136], %170 {strides = array<i32>} : memref<1x8x128xf32, #tpu.memory_space<vmem>>, vector<1x8x128xf32>,
    return
  }
  func.func @transform_0(%arg0: i32) -> (i32, i32, i32) {
    %c0_i32 = arith.constant 0 : i32
    %c0_i32_0 = arith.constant 0 : i32
    %c0_i32_1 = arith.constant 0 : i32
    return %arg0, %c0_i32, %c0_i32_0 : i32, i32, i32
  }
  func.func @transform_1(%arg0: i32) -> (i32, i32, i32) {
    %c0_i32 = arith.constant 0 : i32
    %c0_i32_0 = arith.constant 0 : i32
    %c0_i32_1 = arith.constant 0 : i32
    %c0_i32_2 = arith.constant 0 : i32
    return %c0_i32, %c0_i32_0, %c0_i32_1 : i32, i32, i32
  }
  func.func @transform_2(%arg0: i32) -> (i32, i32, i32) {
    %c0_i32 = arith.constant 0 : i32
    %c0_i32_0 = arith.constant 0 : i32
    %c0_i32_1 = arith.constant 0 : i32
    %c0_i32_2 = arith.constant 0 : i32
    return %c0_i32, %c0_i32_0, %c0_i32_1 : i32, i32, i32
  }
  func.func @transform_3(%arg0: i32) -> (i32, i32, i32) {
    %c0_i32 = arith.constant 0 : i32
    %c0_i32_0 = arith.constant 0 : i32
    %c0_i32_1 = arith.constant 0 : i32
    %c0_i32_2 = arith.constant 0 : i32
    return %c0_i32, %c0_i32_0, %c0_i32_1 : i32, i32, i32
  }
  func.func @transform_4(%arg0: i32) -> (i32, i32, i32) {
    %c0_i32 = arith.constant 0 : i32
    %c0_i32_0 = arith.constant 0 : i32
    %c0_i32_1 = arith.constant 0 : i32
    %c0_i32_2 = arith.constant 0 : i32
    return %c0_i32, %c0_i32_0, %c0_i32_1 : i32, i32, i32
  }
  func.func @transform_5(%arg0: i32) -> (i32, i32) {
    %c0_i32 = arith.constant 0 : i32
    %c0_i32_0 = arith.constant 0 : i32
    %c0_i32_1 = arith.constant 0 : i32
    return %c0_i32, %c0_i32_0 : i32, i32
  }
  func.func @transform_6(%arg0: i32) -> (i32, i32) {
    %c0_i32 = arith.constant 0 : i32
    %c0_i32_0 = arith.constant 0 : i32
    %c0_i32_1 = arith.constant 0 : i32
    return %c0_i32, %c0_i32_0 : i32, i32
  }
  func.func @transform_7(%arg0: i32) -> (i32, i32) {
    %c0_i32 = arith.constant 0 : i32
    %c0_i32_0 = arith.constant 0 : i32
    %c0_i32_1 = arith.constant 0 : i32
    return %c0_i32, %c0_i32_0 : i32, i32
  }
  func.func @transform_8(%arg0: i32) -> (i32, i32) {
    %c0_i32 = arith.constant 0 : i32
    %c0_i32_0 = arith.constant 0 : i32
    %c0_i32_1 = arith.constant 0 : i32
    return %c0_i32, %c0_i32_0 : i32, i32
  }
  func.func @transform_9(%arg0: i32) -> (i32, i32, i32) {
    %c0_i32 = arith.constant 0 : i32
    %c0_i32_0 = arith.constant 0 : i32
    %c0_i32_1 = arith.constant 0 : i32
    return %arg0, %c0_i32, %c0_i32_0 : i32, i32, i32
  }
}

</mosaic_0001>

<llo_original>
// kernel: discriminator_forward.1
$region0: #{discriminator_forward.1}
  #allocation0 [shape = 'u32[]', space=smem, size = 0x4, offset = 0x4, fixed_abs, tag = 'smem constant byte address 0x4 - core index']
  #allocation1 [shape = 'u32[72,128]{1,0:T(1,128)}', space=vmem, size = 0x9000, scoped, tag = 'internal scratch']
  #allocation2 [shape = 'f32[34,64]{1,0:T(8,128)}', space=vmem, size = 0x5000, scoped, tag = 'scratch operand']
  #allocation3 [shape = 'f32[18,128]{1,0:T(8,128)}', space=vmem, size = 0x3000, scoped, tag = 'scratch operand']
  #allocation4 [shape = 'f32[11,256]{1,0:T(8,128)}', space=vmem, size = 0x4000, scoped, tag = 'scratch operand']
  %s0 = inlined_call_operand.vmem [shape: f32[2,66,128], index: 0, kind: input, shape index: {}]
  %s1 = inlined_call_operand.vmem [shape: bf16[4,128,64], index: 1, kind: input, shape index: {}]
  %s2 = inlined_call_operand.vmem [shape: bf16[4,64,128], index: 2, kind: input, shape index: {}]
  %s3 = inlined_call_operand.vmem [shape: bf16[4,128,256], index: 3, kind: input, shape index: {}]
  %s4 = inlined_call_operand.vmem [shape: bf16[4,256,128], index: 4, kind: input, shape index: {}]
  %s5 = inlined_call_operand.vmem [shape: f32[1,64], index: 5, kind: input, shape index: {}]
  %s6 = inlined_call_operand.vmem [shape: f32[1,128], index: 6, kind: input, shape index: {}]
  %s7 = inlined_call_operand.vmem [shape: f32[1,256], index: 7, kind: input, shape index: {}]
  %s8 = inlined_call_operand.vmem [shape: f32[1,128], index: 8, kind: input, shape index: {}]
  %s9 = inlined_call_operand.vmem [shape: f32[2,8,128], index: 9, kind: output, shape index: {}]
  %s10 = sld [smem:[#allocation0]]
  $region69: #{discriminator_forward.1} parent=0
    _
  %s12 = ssub.s32 1, %s10
  %s13 = scalar_select 0, %s12, %s10
  loop: start=0, step=1, limit=4
  $region2: #{discriminator_forward.1} parent=0 // loop_pre_header
    _
  $region3: #{discriminator_forward.1} parent=0 // loop_header
    %s15 = sphi 0, %s19
    %p16 = scmp.ge.s32.totalorder %s15, 4
    %s25 = sphi 0, %s27
    %s28 = sphi 0, %s25
    %s29 = sphi 0, %s28
    %s45 = sphi 0, %s29
    %s49 = sphi 0, %s49
    %s51 = sphi 0, %s49
    %s52 = sphi 0, %s51
    %s66 = sphi 0, %s52
    %s70 = sphi 0, %s70
    %s72 = sphi 0, %s70
    %s73 = sphi 0, %s72
    %s87 = sphi 0, %s73
    %s91 = sphi 0, %s91
    %s93 = sphi 0, %s91
    %s94 = sphi 0, %s93
    %s108 = sphi 0, %s94
    %s112 = sphi 0, %s112
    %s114 = sphi 0, %s112
    %s115 = sphi 0, %s114
    %s129 = sphi 0, %s115
    %s133 = sphi 0, %s133
    %s135 = sphi 0, %s133
    %s136 = sphi 0, %s135
    %s150 = sphi 0, %s136
    %s154 = sphi 0, %s154
    %s156 = sphi 0, %s154
    %s157 = sphi 0, %s156
    %s171 = sphi 0, %s157
    %s175 = sphi 0, %s175
    %s177 = sphi 0, %s175
    %s178 = sphi 0, %s177
    %s192 = sphi 0, %s178
    %s196 = sphi 0, %s196
    %s198 = sphi 0, %s196
    %s199 = sphi 0, %s198
    %s213 = sphi 0, %s199
    %s219 = sphi 0, %s221
    %s222 = sphi 0, %s219
    %s223 = sphi 0, %s222
    %s239 = sphi 0, %s223
  $region4: #{discriminator_forward.1} parent=0 // loop_header_branch
    %18 = sbr.rel (%p16) target = $region8
  $region5: #{discriminator_forward.1} parent=0 // loop_body
    %s20 = ssub.s32 %s15, 1
    %s21 = ssub.s32 %s15, 2
    %s22 = sadd.s32 %s15, 1
    %s23 = ssub.s32 %s15, %s22
    %p24 = scmp.eq.s32.totalorder %s23, 0
    %s26 = sadd.s32 %s25, 1
    %s27 = scalar_select %p24, %s25, %s26
    %p30 = pneg %p24
    %p31 = scmp.eq.s32.totalorder %s15, 1
    %p32 = por %p30, %p31
    %p33 = scmp.ne.s32.totalorder %s25, %s28
    %p34 = scmp.eq.s32.totalorder %s15, 0
    %p35 = por %p33, %p34
    %p36 = scmp.ne.s32.totalorder %s25, %s28
    %p37 = scmp.eq.s32.totalorder %s20, 1
    %p38 = por %p36, %p37
    %p39 = scmp.ne.s32.totalorder %s28, %s29
    %p40 = scmp.eq.s32.totalorder %s20, 0
    %p41 = por %p39, %p40
    %p42 = scmp.ne.s32.totalorder %s28, %s29
    %p43 = scmp.eq.s32.totalorder %s21, 1
    %p44 = por %p42, %p43
    %p46 = scmp.ne.s32.totalorder %s29, %s45
    %p47 = scmp.eq.s32.totalorder %s21, 0
    %p48 = por %p46, %p47
    %s50 = sadd.s32 %s49, 1
    %p53 = scmp.eq.s32.totalorder %s15, 1
    %p54 = scmp.ne.s32.totalorder %s49, %s51
    %p55 = scmp.eq.s32.totalorder %s15, 0
    %p56 = por %p54, %p55
    %p57 = scmp.ne.s32.totalorder %s49, %s51
    %p58 = scmp.eq.s32.totalorder %s20, 1
    %p59 = por %p57, %p58
    %p60 = scmp.ne.s32.totalorder %s51, %s52
    %p61 = scmp.eq.s32.totalorder %s20, 0
    %p62 = por %p60, %p61
    %p63 = scmp.ne.s32.totalorder %s51, %s52
    %p64 = scmp.eq.s32.totalorder %s21, 1
    %p65 = por %p63, %p64
    %p67 = scmp.ne.s32.totalorder %s52, %s66
    %p68 = scmp.eq.s32.totalorder %s21, 0
    %p69 = por %p67, %p68
    %s71 = sadd.s32 %s70, 1
    %p74 = scmp.eq.s32.totalorder %s15, 1
    %p75 = scmp.ne.s32.totalorder %s70, %s72
    %p76 = scmp.eq.s32.totalorder %s15, 0
    %p77 = por %p75, %p76
    %p78 = scmp.ne.s32.totalorder %s70, %s72
    %p79 = scmp.eq.s32.totalorder %s20, 1
    %p80 = por %p78, %p79
    %p81 = scmp.ne.s32.totalorder %s72, %s73
    %p82 = scmp.eq.s32.totalorder %s20, 0
    %p83 = por %p81, %p82
    %p84 = scmp.ne.s32.totalorder %s72, %s73
    %p85 = scmp.eq.s32.totalorder %s21, 1
    %p86 = por %p84, %p85
    %p88 = scmp.ne.s32.totalorder %s73, %s87
    %p89 = scmp.eq.s32.totalorder %s21, 0
    %p90 = por %p88, %p89
    %s92 = sadd.s32 %s91, 1
    %p95 = scmp.eq.s32.totalorder %s15, 1
    %p96 = scmp.ne.s32.totalorder %s91, %s93
    %p97 = scmp.eq.s32.totalorder %s15, 0
    %p98 = por %p96, %p97
    %p99 = scmp.ne.s32.totalorder %s91, %s93
    %p100 = scmp.eq.s32.totalorder %s20, 1
    %p101 = por %p99, %p100
    %p102 = scmp.ne.s32.totalorder %s93, %s94
    %p103 = scmp.eq.s32.totalorder %s20, 0
    %p104 = por %p102, %p103
    %p105 = scmp.ne.s32.totalorder %s93, %s94
    %p106 = scmp.eq.s32.totalorder %s21, 1
    %p107 = por %p105, %p106
    %p109 = scmp.ne.s32.totalorder %s94, %s108
    %p110 = scmp.eq.s32.totalorder %s21, 0
    %p111 = por %p109, %p110
    %s113 = sadd.s32 %s112, 1
    %p116 = scmp.eq.s32.totalorder %s15, 1
    %p117 = scmp.ne.s32.totalorder %s112, %s114
    %p118 = scmp.eq.s32.totalorder %s15, 0
    %p119 = por %p117, %p118
    %p120 = scmp.ne.s32.totalorder %s112, %s114
    %p121 = scmp.eq.s32.totalorder %s20, 1
    %p122 = por %p120, %p121
    %p123 = scmp.ne.s32.totalorder %s114, %s115
    %p124 = scmp.eq.s32.totalorder %s20, 0
    %p125 = por %p123, %p124
    %p126 = scmp.ne.s32.totalorder %s114, %s115
    %p127 = scmp.eq.s32.totalorder %s21, 1
    %p128 = por %p126, %p127
    %p130 = scmp.ne.s32.totalorder %s115, %s129
    %p131 = scmp.eq.s32.totalorder %s21, 0
    %p132 = por %p130, %p131
    %s134 = sadd.s32 %s133, 1
    %p137 = scmp.eq.s32.totalorder %s15, 1
    %p138 = scmp.ne.s32.totalorder %s133, %s135
    %p139 = scmp.eq.s32.totalorder %s15, 0
    %p140 = por %p138, %p139
    %p141 = scmp.ne.s32.totalorder %s133, %s135
    %p142 = scmp.eq.s32.totalorder %s20, 1
    %p143 = por %p141, %p142
    %p144 = scmp.ne.s32.totalorder %s135, %s136
    %p145 = scmp.eq.s32.totalorder %s20, 0
    %p146 = por %p144, %p145
    %p147 = scmp.ne.s32.totalorder %s135, %s136
    %p148 = scmp.eq.s32.totalorder %s21, 1
    %p149 = por %p147, %p148
    %p151 = scmp.ne.s32.totalorder %s136, %s150
    %p152 = scmp.eq.s32.totalorder %s21, 0
    %p153 = por %p151, %p152
    %s155 = sadd.s32 %s154, 1
    %p158 = scmp.eq.s32.totalorder %s15, 1
    %p159 = scmp.ne.s32.totalorder %s154, %s156
    %p160 = scmp.eq.s32.totalorder %s15, 0
    %p161 = por %p159, %p160
    %p162 = scmp.ne.s32.totalorder %s154, %s156
    %p163 = scmp.eq.s32.totalorder %s20, 1
    %p164 = por %p162, %p163
    %p165 = scmp.ne.s32.totalorder %s156, %s157
    %p166 = scmp.eq.s32.totalorder %s20, 0
    %p167 = por %p165, %p166
    %p168 = scmp.ne.s32.totalorder %s156, %s157
    %p169 = scmp.eq.s32.totalorder %s21, 1
    %p170 = por %p168, %p169
    %p172 = scmp.ne.s32.totalorder %s157, %s171
    %p173 = scmp.eq.s32.totalorder %s21, 0
    %p174 = por %p172, %p173
    %s176 = sadd.s32 %s175, 1
    %p179 = scmp.eq.s32.totalorder %s15, 1
    %p180 = scmp.ne.s32.totalorder %s175, %s177
    %p181 = scmp.eq.s32.totalorder %s15, 0
    %p182 = por %p180, %p181
    %p183 = scmp.ne.s32.totalorder %s175, %s177
    %p184 = scmp.eq.s32.totalorder %s20, 1
    %p185 = por %p183, %p184
    %p186 = scmp.ne.s32.totalorder %s177, %s178
    %p187 = scmp.eq.s32.totalorder %s20, 0
    %p188 = por %p186, %p187
    %p189 = scmp.ne.s32.totalorder %s177, %s178
    %p190 = scmp.eq.s32.totalorder %s21, 1
    %p191 = por %p189, %p190
    %p193 = scmp.ne.s32.totalorder %s178, %s192
    %p194 = scmp.eq.s32.totalorder %s21, 0
    %p195 = por %p193, %p194
    %s197 = sadd.s32 %s196, 1
    %p200 = scmp.eq.s32.totalorder %s15, 1
    %p201 = scmp.ne.s32.totalorder %s196, %s198
    %p202 = scmp.eq.s32.totalorder %s15, 0
    %p203 = por %p201, %p202
    %p204 = scmp.ne.s32.totalorder %s196, %s198
    %p205 = scmp.eq.s32.totalorder %s20, 1
    %p206 = por %p204, %p205
    %p207 = scmp.ne.s32.totalorder %s198, %s199
    %p208 = scmp.eq.s32.totalorder %s20, 0
    %p209 = por %p207, %p208
    %p210 = scmp.ne.s32.totalorder %s198, %s199
    %p211 = scmp.eq.s32.totalorder %s21, 1
    %p212 = por %p210, %p211
    %p214 = scmp.ne.s32.totalorder %s199, %s213
    %p215 = scmp.eq.s32.totalorder %s21, 0
    %p216 = por %p214, %p215
    %s217 = ssub.s32 %s15, %s22
    %p218 = scmp.eq.s32.totalorder %s217, 0
    %s220 = sadd.s32 %s219, 1
    %s221 = scalar_select %p218, %s219, %s220
    %p224 = pneg %p218
    %p225 = scmp.eq.s32.totalorder %s15, 1
    %p226 = por %p224, %p225
    %p227 = scmp.ne.s32.totalorder %s219, %s222
    %p228 = scmp.eq.s32.totalorder %s15, 0
    %p229 = por %p227, %p228
    %p230 = scmp.ne.s32.totalorder %s219, %s222
    %p231 = scmp.eq.s32.totalorder %s20, 1
    %p232 = por %p230, %p231
    %p233 = scmp.ne.s32.totalorder %s222, %s223
    %p234 = scmp.eq.s32.totalorder %s20, 0
    %p235 = por %p233, %p234
    %p236 = scmp.ne.s32.totalorder %s222, %s223
    %p237 = scmp.eq.s32.totalorder %s21, 1
    %p238 = por %p236, %p237
    %p240 = scmp.ne.s32.totalorder %s223, %s239
    %p241 = scmp.eq.s32.totalorder %s21, 0
    %p242 = por %p240, %p241
    %p243 = scmp.le.s32.totalorder 1, %s15
    %p244 = scmp.lt.s32.totalorder %s15, 3
    %p245 = pnand %p243, %p244
    %p246 = pneg %p245
    // Predicated region
    $region9: #{discriminator_forward.1} parent=5 // pred_check
      _
    $region10: #{discriminator_forward.1} parent=5 // pred_check_branch
      %248 = sbr.rel (%p245) target = $region12
    $region11: #{discriminator_forward.1} parent=5 // pred_region
      %s249 = ssub.s32 %s15, 1
      // Predicated region
      $region13: #{discriminator_forward.1} parent=11 // pred_check
        %p250 = pneg %p62
      $region14: #{discriminator_forward.1} parent=11 // pred_check_branch
        %252 = sbr.rel (%p250) target = $region16
      $region15: #{discriminator_forward.1} parent=11 // pred_region
        _
      $region16: #{discriminator_forward.1} parent=11 // pred_fallthru
        _
      // Predicated region
      $region17: #{discriminator_forward.1} parent=11 // pred_check
        %p253 = pneg %p83
      $region18: #{discriminator_forward.1} parent=11 // pred_check_branch
        %255 = sbr.rel (%p253) target = $region20
      $region19: #{discriminator_forward.1} parent=11 // pred_region
        _
      $region20: #{discriminator_forward.1} parent=11 // pred_fallthru
        _
      // Predicated region
      $region21: #{discriminator_forward.1} parent=11 // pred_check
        %p256 = pneg %p104
      $region22: #{discriminator_forward.1} parent=11 // pred_check_branch
        %258 = sbr.rel (%p256) target = $region24
      $region23: #{discriminator_forward.1} parent=11 // pred_region
        _
      $region24: #{discriminator_forward.1} parent=11 // pred_fallthru
        _
      // Predicated region
      $region25: #{discriminator_forward.1} parent=11 // pred_check
        %p259 = pneg %p125
      $region26: #{discriminator_forward.1} parent=11 // pred_check_branch
        %261 = sbr.rel (%p259) target = $region28
      $region27: #{discriminator_forward.1} parent=11 // pred_region
        _
      $region28: #{discriminator_forward.1} parent=11 // pred_fallthru
        _
      // Predicated region
      $region29: #{discriminator_forward.1} parent=11 // pred_check
        %p262 = pneg %p146
      $region30: #{discriminator_forward.1} parent=11 // pred_check_branch
        %264 = sbr.rel (%p262) target = $region32
      $region31: #{discriminator_forward.1} parent=11 // pred_region
        _
      $region32: #{discriminator_forward.1} parent=11 // pred_fallthru
        _
      // Predicated region
      $region33: #{discriminator_forward.1} parent=11 // pred_check
        %p265 = pneg %p167
      $region34: #{discriminator_forward.1} parent=11 // pred_check_branch
        %267 = sbr.rel (%p265) target = $region36
      $region35: #{discriminator_forward.1} parent=11 // pred_region
        _
      $region36: #{discriminator_forward.1} parent=11 // pred_fallthru
        _
      // Predicated region
      $region37: #{discriminator_forward.1} parent=11 // pred_check
        %p268 = pneg %p188
      $region38: #{discriminator_forward.1} parent=11 // pred_check_branch
        %270 = sbr.rel (%p268) target = $region40
      $region39: #{discriminator_forward.1} parent=11 // pred_region
        _
      $region40: #{discriminator_forward.1} parent=11 // pred_fallthru
        _
      // Predicated region
      $region41: #{discriminator_forward.1} parent=11 // pred_check
        %p271 = pneg %p209
      $region42: #{discriminator_forward.1} parent=11 // pred_check_branch
        %273 = sbr.rel (%p271) target = $region44
      $region43: #{discriminator_forward.1} parent=11 // pred_region
        _
      $region44: #{discriminator_forward.1} parent=11 // pred_fallthru
        _
    $region12: #{discriminator_forward.1} parent=5 // pred_fallthru
      _
    %p274 = scmp.lt.s32.totalorder %s15, 2
    // Predicated region
    $region45: #{discriminator_forward.1} parent=5 // pred_check
      %p275 = pneg %p274
    $region46: #{discriminator_forward.1} parent=5 // pred_check_branch
      %277 = sbr.rel (%p275) target = $region48
    $region47: #{discriminator_forward.1} parent=5 // pred_region
      // Predicated region
      $region49: #{discriminator_forward.1} parent=47 // pred_check
        %p278 = pneg %p35
      $region50: #{discriminator_forward.1} parent=47 // pred_check_branch
        %280 = sbr.rel (%p278) target = $region52
      $region51: #{discriminator_forward.1} parent=47 // pred_region
        %p281 = scmp.lt.s32.totalorder %s15, 1
        %s282 = scalar_select %p281, %s15, 1
        %s283 = smul.addr %s282, 9
        %s284 = smul.addr %s283, 8
        %s285 = scalar_lea.vmem %s0, %s284
      $region52: #{discriminator_forward.1} parent=47 // pred_fallthru
        _
    $region48: #{discriminator_forward.1} parent=5 // pred_fallthru
      _
    %p286 = scmp.le.s32.totalorder 1, %s15
    %p287 = scmp.lt.s32.totalorder %s15, 3
    %p288 = pnand %p286, %p287
    %p289 = pneg %p288
    // Predicated region
    $region53: #{discriminator_forward.1} parent=5 // pred_check
      _
    $region54: #{discriminator_forward.1} parent=5 // pred_check_branch
      %291 = sbr.rel (%p288) target = $region56
    $region55: #{discriminator_forward.1} parent=5 // pred_region
      %s292 = ssub.s32 %s15, 1
      %p293 = scmp.lt.s32.totalorder %s20, 1
      %s294 = scalar_select %p293, %s20, 1
      %s295 = smul.addr %s294, 9
      %s296 = smul.addr %s295, 8
      %s297 = scalar_lea.vmem %s0, %s296
      %p298 = pneg %p41
      %p299 = pneg %p38
      %p300 = pneg %p62
      %p301 = pneg %p59
      %p302 = pneg %p83
      %p303 = pneg %p80
      %p304 = pneg %p104
      %p305 = pneg %p101
      %p306 = pneg %p125
      %p307 = pneg %p122
      %p308 = pneg %p146
      %p309 = pneg %p143
      %p310 = pneg %p167
      %p311 = pneg %p164
      %p312 = pneg %p188
      %p313 = pneg %p185
      %p314 = pneg %p209
      %p315 = pneg %p206
      %p316 = pneg %p235
      %p317 = pneg %p232
      %p318 = scmp.lt.s32.totalorder %s20, 1
      %s319 = scalar_select %p318, %s20, 1
      %s320 = smul.addr %s319, 8
      %s321 = scalar_lea.vmem %s9, %s320
      %p322 = scmp.lt.s32.totalorder %s20, 1
      %s323 = scalar_select %p322, %s20, 1
      %s324 = smul.addr %s323, 9
      %s325 = smul.addr %s324, 8
      %s326 = scalar_lea.vmem %s0, %s325
      %p327 = scmp.lt.s32.totalorder %s20, 1
      %s328 = scalar_select %p327, %s20, 1
      %s329 = smul.addr %s328, 8
      %s330 = scalar_lea.vmem %s9, %s329
      %v332 = vld [vmem:[%s326] ss:$2 sm:$0xff]
      %s333 = scalar_lea.vmem %s326, 16
      %v334 = vld [vmem:[%s333] ss:$2 sm:$0xff]
      %s335 = scalar_lea.vmem %s326, 32
      %v336 = vld [vmem:[%s335] ss:$2 sm:$0xff]
      %s337 = scalar_lea.vmem %s326, 48
      %v338 = vld [vmem:[%s337] ss:$2 sm:$0xff]
      %v339 = vpack.c.bf16 %v334, %v332
      %v340 = vpack.c.bf16 %v338, %v336
      %v341 = vld [vmem:[%s1] sm:$0xf]
      %v342 = vld [vmem:[%s1 + $0x4] sm:$0xf]
      %v343 = vld [vmem:[%s1 + $0x8] sm:$0xf]
      %v344 = vld [vmem:[%s1 + $0xc] sm:$0xf]
      %v345 = vld [vmem:[%s1 + $0x10] sm:$0xf]
      %v346 = vld [vmem:[%s1 + $0x14] sm:$0xf]
      %v347 = vld [vmem:[%s1 + $0x18] sm:$0xf]
      %v348 = vld [vmem:[%s1 + $0x1c] sm:$0xf]
      %v349 = vld [vmem:[%s1 + $0x20] sm:$0xf]
      %v350 = vld [vmem:[%s1 + $0x24] sm:$0xf]
      %v351 = vld [vmem:[%s1 + $0x28] sm:$0xf]
      %v352 = vld [vmem:[%s1 + $0x2c] sm:$0xf]
      %v353 = vld [vmem:[%s1 + $0x30] sm:$0xf]
      %v354 = vld [vmem:[%s1 + $0x34] sm:$0xf]
      %v355 = vld [vmem:[%s1 + $0x38] sm:$0xf]
      %v356 = vld [vmem:[%s1 + $0x3c] sm:$0xf]
      %s357 = scalar_lea.vmem %s326, 1
      %v358 = vld [vmem:[%s357] ss:$2 sm:$0xff]
      %s359 = scalar_lea.vmem %s326, 17
      %v360 = vld [vmem:[%s359] ss:$2 sm:$0xff]
      %s361 = scalar_lea.vmem %s326, 33
      %v362 = vld [vmem:[%s361] ss:$2 sm:$0xff]
      %s363 = scalar_lea.vmem %s326, 49
      %v364 = vld [vmem:[%s363] ss:$2 sm:$0xff]
      %v365 = vpack.c.bf16 %v360, %v358
      %v366 = vpack.c.bf16 %v364, %v362
      %s367 = scalar_lea.vmem %s1, 64
      %v368 = vld [vmem:[%s367] sm:$0xf]
      %v369 = vld [vmem:[%s367 + $0x4] sm:$0xf]
      %v370 = vld [vmem:[%s367 + $0x8] sm:$0xf]
      %v371 = vld [vmem:[%s367 + $0xc] sm:$0xf]
      %v372 = vld [vmem:[%s367 + $0x10] sm:$0xf]
      %v373 = vld [vmem:[%s367 + $0x14] sm:$0xf]
      %v374 = vld [vmem:[%s367 + $0x18] sm:$0xf]
      %v375 = vld [vmem:[%s367 + $0x1c] sm:$0xf]
      %v376 = vld [vmem:[%s367 + $0x20] sm:$0xf]
      %v377 = vld [vmem:[%s367 + $0x24] sm:$0xf]
      %v378 = vld [vmem:[%s367 + $0x28] sm:$0xf]
      %v379 = vld [vmem:[%s367 + $0x2c] sm:$0xf]
      %v380 = vld [vmem:[%s367 + $0x30] sm:$0xf]
      %v381 = vld [vmem:[%s367 + $0x34] sm:$0xf]
      %v382 = vld [vmem:[%s367 + $0x38] sm:$0xf]
      %v383 = vld [vmem:[%s367 + $0x3c] sm:$0xf]
      %v400 = vunpack.c.l.b16 %v368
      %v401 = vunpack.c.l.b16 %v369
      %v402 = vunpack.c.l.b16 %v370
      %v403 = vunpack.c.l.b16 %v371
      %v404 = vunpack.c.l.b16 %v372
      %v405 = vunpack.c.l.b16 %v373
      %v406 = vunpack.c.l.b16 %v374
      %v407 = vunpack.c.l.b16 %v375
      %v408 = vunpack.c.l.b16 %v376
      %v409 = vunpack.c.l.b16 %v377
      %v410 = vunpack.c.l.b16 %v378
      %v411 = vunpack.c.l.b16 %v379
      %v412 = vunpack.c.l.b16 %v380
      %v413 = vunpack.c.l.b16 %v381
      %v414 = vunpack.c.l.b16 %v382
      %v415 = vunpack.c.l.b16 %v383
      %v416 = vpack.c.b16 %v401, %v400
      %v417 = vpack.c.b16 %v403, %v402
      %v418 = vpack.c.b16 %v405, %v404
      %v419 = vpack.c.b16 %v407, %v406
      %v420 = vpack.c.b16 %v409, %v408
      %v421 = vpack.c.b16 %v411, %v410
      %v422 = vpack.c.b16 %v413, %v412
      %v423 = vpack.c.b16 %v415, %v414
      %432 = vmatpush.bf16.msra.mxu0 %v423
      %433 = vmatpush.bf16.msra.mxu0 %v422
      %434 = vmatpush.bf16.msra.mxu0 %v421
      %435 = vmatpush.bf16.msra.mxu0 %v420
      %436 = vmatpush.bf16.msra.mxu0 %v419
      %437 = vmatpush.bf16.msra.mxu0 %v418
      %438 = vmatpush.bf16.msra.mxu0 %v417
      %439 = vmatpush.bf16.msra.mxu0 %v416
      %440 = vmatmul.bf16.gmra.mxu0 %v365
      %v441 = vpop.f32.mrf.mxu0
      %v442 = vadd.f32 0.0, %v441
      %v443 = vpop.f32.mrf.mxu0
      %v444 = vadd.f32 0.0, %v443
      %445 = vmatmul.bf16.gmra.mxu0 %v366
      %v446 = vpop.f32.mrf.mxu0
      %v447 = vadd.f32 0.0, %v446
      %v448 = vpop.f32.mrf.mxu0
      %v449 = vadd.f32 0.0, %v448
      %450 = vdwg.mxu0
      %v467 = vunpack.c.l.b16 %v341
      %v468 = vunpack.c.l.b16 %v342
      %v469 = vunpack.c.l.b16 %v343
      %v470 = vunpack.c.l.b16 %v344
      %v471 = vunpack.c.l.b16 %v345
      %v472 = vunpack.c.l.b16 %v346
      %v473 = vunpack.c.l.b16 %v347
      %v474 = vunpack.c.l.b16 %v348
      %v475 = vunpack.c.l.b16 %v349
      %v476 = vunpack.c.l.b16 %v350
      %v477 = vunpack.c.l.b16 %v351
      %v478 = vunpack.c.l.b16 %v352
      %v479 = vunpack.c.l.b16 %v353
      %v480 = vunpack.c.l.b16 %v354
      %v481 = vunpack.c.l.b16 %v355
      %v482 = vunpack.c.l.b16 %v356
      %v483 = vpack.c.b16 %v468, %v467
      %v484 = vpack.c.b16 %v470, %v469
      %v485 = vpack.c.b16 %v472, %v471
      %v486 = vpack.c.b16 %v474, %v473
      %v487 = vpack.c.b16 %v476, %v475
      %v488 = vpack.c.b16 %v478, %v477
      %v489 = vpack.c.b16 %v480, %v479
      %v490 = vpack.c.b16 %v482, %v481
      %499 = vmatpush.bf16.msra.mxu0 %v490
      %500 = vmatpush.bf16.msra.mxu0 %v489
      %501 = vmatpush.bf16.msra.mxu0 %v488
      %502 = vmatpush.bf16.msra.mxu0 %v487
      %503 = vmatpush.bf16.msra.mxu0 %v486
      %504 = vmatpush.bf16.msra.mxu0 %v485
      %505 = vmatpush.bf16.msra.mxu0 %v484
      %506 = vmatpush.bf16.msra.mxu0 %v483
      %507 = vmatmul.bf16.gmra.mxu0 %v339
      %v508 = vpop.f32.mrf.mxu0
      %v509 = vadd.f32 %v442, %v508
      %v510 = vpop.f32.mrf.mxu0
      %v511 = vadd.f32 %v444, %v510
      %512 = vmatmul.bf16.gmra.mxu0 %v340
      %v513 = vpop.f32.mrf.mxu0
      %v514 = vadd.f32 %v447, %v513
      %v515 = vpop.f32.mrf.mxu0
      %v516 = vadd.f32 %v449, %v515
      %517 = vdwg.mxu0
      %s518 = scalar_lea.vmem %s326, 2
      %v519 = vld [vmem:[%s518] ss:$2 sm:$0xff]
      %s520 = scalar_lea.vmem %s326, 18
      %v521 = vld [vmem:[%s520] ss:$2 sm:$0xff]
      %s522 = scalar_lea.vmem %s326, 34
      %v523 = vld [vmem:[%s522] ss:$2 sm:$0xff]
      %s524 = scalar_lea.vmem %s326, 50
      %v525 = vld [vmem:[%s524] ss:$2 sm:$0xff]
      %v526 = vpack.c.bf16 %v521, %v519
      %v527 = vpack.c.bf16 %v525, %v523
      %s528 = scalar_lea.vmem %s1, 128
      %v529 = vld [vmem:[%s528] sm:$0xf]
      %v530 = vld [vmem:[%s528 + $0x4] sm:$0xf]
      %v531 = vld [vmem:[%s528 + $0x8] sm:$0xf]
      %v532 = vld [vmem:[%s528 + $0xc] sm:$0xf]
      %v533 = vld [vmem:[%s528 + $0x10] sm:$0xf]
      %v534 = vld [vmem:[%s528 + $0x14] sm:$0xf]
      %v535 = vld [vmem:[%s528 + $0x18] sm:$0xf]
      %v536 = vld [vmem:[%s528 + $0x1c] sm:$0xf]
      %v537 = vld [vmem:[%s528 + $0x20] sm:$0xf]
      %v538 = vld [vmem:[%s528 + $0x24] sm:$0xf]
      %v539 = vld [vmem:[%s528 + $0x28] sm:$0xf]
      %v540 = vld [vmem:[%s528 + $0x2c] sm:$0xf]
      %v541 = vld [vmem:[%s528 + $0x30] sm:$0xf]
      %v542 = vld [vmem:[%s528 + $0x34] sm:$0xf]
      %v543 = vld [vmem:[%s528 + $0x38] sm:$0xf]
      %v544 = vld [vmem:[%s528 + $0x3c] sm:$0xf]
      %v561 = vunpack.c.l.b16 %v529
      %v562 = vunpack.c.l.b16 %v530
      %v563 = vunpack.c.l.b16 %v531
      %v564 = vunpack.c.l.b16 %v532
      %v565 = vunpack.c.l.b16 %v533
      %v566 = vunpack.c.l.b16 %v534
      %v567 = vunpack.c.l.b16 %v535
      %v568 = vunpack.c.l.b16 %v536
      %v569 = vunpack.c.l.b16 %v537
      %v570 = vunpack.c.l.b16 %v538
      %v571 = vunpack.c.l.b16 %v539
      %v572 = vunpack.c.l.b16 %v540
      %v573 = vunpack.c.l.b16 %v541
      %v574 = vunpack.c.l.b16 %v542
      %v575 = vunpack.c.l.b16 %v543
      %v576 = vunpack.c.l.b16 %v544
      %v577 = vpack.c.b16 %v562, %v561
      %v578 = vpack.c.b16 %v564, %v563
      %v579 = vpack.c.b16 %v566, %v565
      %v580 = vpack.c.b16 %v568, %v567
      %v581 = vpack.c.b16 %v570, %v569
      %v582 = vpack.c.b16 %v572, %v571
      %v583 = vpack.c.b16 %v574, %v573
      %v584 = vpack.c.b16 %v576, %v575
      %593 = vmatpush.bf16.msra.mxu0 %v584
      %594 = vmatpush.bf16.msra.mxu0 %v583
      %595 = vmatpush.bf16.msra.mxu0 %v582
      %596 = vmatpush.bf16.msra.mxu0 %v581
      %597 = vmatpush.bf16.msra.mxu0 %v580
      %598 = vmatpush.bf16.msra.mxu0 %v579
      %599 = vmatpush.bf16.msra.mxu0 %v578
      %600 = vmatpush.bf16.msra.mxu0 %v577
      %601 = vmatmul.bf16.gmra.mxu0 %v526
      %v602 = vpop.f32.mrf.mxu0
      %v603 = vadd.f32 0.0, %v602
      %v604 = vpop.f32.mrf.mxu0
      %v605 = vadd.f32 0.0, %v604
      %606 = vmatmul.bf16.gmra.mxu0 %v527
      %v607 = vpop.f32.mrf.mxu0
      %v608 = vadd.f32 0.0, %v607
      %v609 = vpop.f32.mrf.mxu0
      %v610 = vadd.f32 0.0, %v609
      %611 = vdwg.mxu0
      %v612 = vadd.f32 %v509, %v603
      %v613 = vadd.f32 %v511, %v605
      %v614 = vadd.f32 %v514, %v608
      %v615 = vadd.f32 %v516, %v610
      %s616 = scalar_lea.vmem %s326, 3
      %v617 = vld [vmem:[%s616] ss:$2 sm:$0xff]
      %s618 = scalar_lea.vmem %s326, 19
      %v619 = vld [vmem:[%s618] ss:$2 sm:$0xff]
      %s620 = scalar_lea.vmem %s326, 35
      %v621 = vld [vmem:[%s620] ss:$2 sm:$0xff]
      %s622 = scalar_lea.vmem %s326, 51
      %v623 = vld [vmem:[%s622] ss:$2 sm:$0xff]
      %v624 = vpack.c.bf16 %v619, %v617
      %v625 = vpack.c.bf16 %v623, %v621
      %s626 = scalar_lea.vmem %s1, 192
      %v627 = vld [vmem:[%s626] sm:$0xf]
      %v628 = vld [vmem:[%s626 + $0x4] sm:$0xf]
      %v629 = vld [vmem:[%s626 + $0x8] sm:$0xf]
      %v630 = vld [vmem:[%s626 + $0xc] sm:$0xf]
      %v631 = vld [vmem:[%s626 + $0x10] sm:$0xf]
      %v632 = vld [vmem:[%s626 + $0x14] sm:$0xf]
      %v633 = vld [vmem:[%s626 + $0x18] sm:$0xf]
      %v634 = vld [vmem:[%s626 + $0x1c] sm:$0xf]
      %v635 = vld [vmem:[%s626 + $0x20] sm:$0xf]
      %v636 = vld [vmem:[%s626 + $0x24] sm:$0xf]
      %v637 = vld [vmem:[%s626 + $0x28] sm:$0xf]
      %v638 = vld [vmem:[%s626 + $0x2c] sm:$0xf]
      %v639 = vld [vmem:[%s626 + $0x30] sm:$0xf]
      %v640 = vld [vmem:[%s626 + $0x34] sm:$0xf]
      %v641 = vld [vmem:[%s626 + $0x38] sm:$0xf]
      %v642 = vld [vmem:[%s626 + $0x3c] sm:$0xf]
      %v659 = vunpack.c.l.b16 %v627
      %v660 = vunpack.c.l.b16 %v628
      %v661 = vunpack.c.l.b16 %v629
      %v662 = vunpack.c.l.b16 %v630
      %v663 = vunpack.c.l.b16 %v631
      %v664 = vunpack.c.l.b16 %v632
      %v665 = vunpack.c.l.b16 %v633
      %v666 = vunpack.c.l.b16 %v634
      %v667 = vunpack.c.l.b16 %v635
      %v668 = vunpack.c.l.b16 %v636
      %v669 = vunpack.c.l.b16 %v637
      %v670 = vunpack.c.l.b16 %v638
      %v671 = vunpack.c.l.b16 %v639
      %v672 = vunpack.c.l.b16 %v640
      %v673 = vunpack.c.l.b16 %v641
      %v674 = vunpack.c.l.b16 %v642
      %v675 = vpack.c.b16 %v660, %v659
      %v676 = vpack.c.b16 %v662, %v661
      %v677 = vpack.c.b16 %v664, %v663
      %v678 = vpack.c.b16 %v666, %v665
      %v679 = vpack.c.b16 %v668, %v667
      %v680 = vpack.c.b16 %v670, %v669
      %v681 = vpack.c.b16 %v672, %v671
      %v682 = vpack.c.b16 %v674, %v673
      %691 = vmatpush.bf16.msra.mxu0 %v682
      %692 = vmatpush.bf16.msra.mxu0 %v681
      %693 = vmatpush.bf16.msra.mxu0 %v680
      %694 = vmatpush.bf16.msra.mxu0 %v679
      %695 = vmatpush.bf16.msra.mxu0 %v678
      %696 = vmatpush.bf16.msra.mxu0 %v677
      %697 = vmatpush.bf16.msra.mxu0 %v676
      %698 = vmatpush.bf16.msra.mxu0 %v675
      %699 = vmatmul.bf16.gmra.mxu0 %v624
      %v700 = vpop.f32.mrf.mxu0
      %v701 = vadd.f32 0.0, %v700
      %v702 = vpop.f32.mrf.mxu0
      %v703 = vadd.f32 0.0, %v702
      %704 = vmatmul.bf16.gmra.mxu0 %v625
      %v705 = vpop.f32.mrf.mxu0
      %v706 = vadd.f32 0.0, %v705
      %v707 = vpop.f32.mrf.mxu0
      %v708 = vadd.f32 0.0, %v707
      %709 = vdwg.mxu0
      %v710 = vadd.f32 %v612, %v701
      %v711 = vadd.f32 %v613, %v703
      %v712 = vadd.f32 %v614, %v706
      %v713 = vadd.f32 %v615, %v708
      %v714 = vld [vmem:[%s5] sm:$0x1]
      %v716 = vperm.slane %v714, 0
      %v718 = vadd.f32 %v710, %v716
      %v719 = vadd.f32 %v711, %v716
      %v720 = vadd.f32 %v712, %v716
      %v721 = vadd.f32 %v713, %v716
      %vm722 = vcmp.gt.f32.partialorder %v718, 0.0
      %vm723 = vcmp.gt.f32.partialorder %v719, 0.0
      %vm724 = vcmp.gt.f32.partialorder %v720, 0.0
      %vm725 = vcmp.gt.f32.partialorder %v721, 0.0
      %v726 = vmul.f32 %v718, 0.2
      %v727 = vmul.f32 %v719, 0.2
      %v728 = vmul.f32 %v720, 0.2
      %v729 = vmul.f32 %v721, 0.2
      %v730 = vsel %vm722, %v718, %v726
      %v731 = vsel %vm723, %v719, %v727
      %v732 = vsel %vm724, %v720, %v728
      %v733 = vsel %vm725, %v721, %v729
      %vm734 = vcmask 523264
      %735 = vst.msk [vmem:[#allocation2] sm:$0xff] %vm734, 0.0
      %736 = vst.msk [vmem:[#allocation2 + $0x8] sm:$0xff] %vm734, 0.0
      %737 = vst.msk [vmem:[#allocation2 + $0x10] sm:$0xff] %vm734, 0.0
      %738 = vst.msk [vmem:[#allocation2 + $0x18] sm:$0xff] %vm734, 0.0
      %vm739 = vcmask 517120
      %740 = vst.msk [vmem:[#allocation2 + $0x20] sm:$0x3] %vm739, 0.0
      %741 = vst.msk [vmem:[#allocation2 + $0x1] sm:$0xff] %vm734, %v730
      %742 = vst.msk [vmem:[#allocation2 + $0x9] sm:$0xff] %vm734, %v731
      %743 = vst.msk [vmem:[#allocation2 + $0x11] sm:$0xff] %vm734, %v732
      %744 = vst.msk [vmem:[#allocation2 + $0x19] sm:$0xff] %vm734, %v733
      %v745 = vld [vmem:[#allocation2] ss:$2 sm:$0xff]
      %s746 = scalar_lea.vmem [#allocation2], 16
      %v747 = vld [vmem:[%s746] ss:$2 sm:$0xff]
      %v748 = vpack.c.bf16 %v747, %v745
      %v749 = vld [vmem:[%s2] sm:$0xf]
      %v750 = vld [vmem:[%s2 + $0x4] sm:$0xf]
      %v751 = vld [vmem:[%s2 + $0x8] sm:$0xf]
      %v752 = vld [vmem:[%s2 + $0xc] sm:$0xf]
      %v753 = vld [vmem:[%s2 + $0x10] sm:$0xf]
      %v754 = vld [vmem:[%s2 + $0x14] sm:$0xf]
      %v755 = vld [vmem:[%s2 + $0x18] sm:$0xf]
      %v756 = vld [vmem:[%s2 + $0x1c] sm:$0xf]
      %s757 = scalar_lea.vmem [#allocation2], 1
      %v758 = vld [vmem:[%s757] ss:$2 sm:$0xff]
      %s759 = scalar_lea.vmem [#allocation2], 17
      %v760 = vld [vmem:[%s759] ss:$2 sm:$0xff]
      %v761 = vpack.c.bf16 %v760, %v758
      %s762 = scalar_lea.vmem %s2, 32
      %v763 = vld [vmem:[%s762] sm:$0xf]
      %v764 = vld [vmem:[%s762 + $0x4] sm:$0xf]
      %v765 = vld [vmem:[%s762 + $0x8] sm:$0xf]
      %v766 = vld [vmem:[%s762 + $0xc] sm:$0xf]
      %v767 = vld [vmem:[%s762 + $0x10] sm:$0xf]
      %v768 = vld [vmem:[%s762 + $0x14] sm:$0xf]
      %v769 = vld [vmem:[%s762 + $0x18] sm:$0xf]
      %v770 = vld [vmem:[%s762 + $0x1c] sm:$0xf]
      %v779 = vunpack.c.l.b16 %v763
      %v780 = vunpack.c.l.b16 %v764
      %v781 = vunpack.c.l.b16 %v765
      %v782 = vunpack.c.l.b16 %v766
      %v783 = vunpack.c.l.b16 %v767
      %v784 = vunpack.c.l.b16 %v768
      %v785 = vunpack.c.l.b16 %v769
      %v786 = vunpack.c.l.b16 %v770
      %v787 = vpack.c.b16 %v780, %v779
      %v788 = vpack.c.b16 %v782, %v781
      %v789 = vpack.c.b16 %v784, %v783
      %v790 = vpack.c.b16 %v786, %v785
      %v796 = vsel %vm734, %v761, 0
      %798 = vmatpush.bf16.msra.mxu0 0
      %799 = vmatpush.bf16.msra.mxu0 0
      %800 = vmatpush.bf16.msra.mxu0 0
      %801 = vmatpush.bf16.msra.mxu0 0
      %802 = vmatpush.bf16.msra.mxu0 %v790
      %803 = vmatpush.bf16.msra.mxu0 %v789
      %804 = vmatpush.bf16.msra.mxu0 %v788
      %805 = vmatpush.bf16.msra.mxu0 %v787
      %806 = vmatmul.bf16.gmra.mxu0 %v796
      %v807 = vpop.f32.mrf.mxu0
      %v808 = vadd.f32 0.0, %v807
      %v809 = vpop.f32.mrf.mxu0
      %v810 = vadd.f32 0.0, %v809
      %811 = vdwg.mxu0
      %v820 = vunpack.c.l.b16 %v749
      %v821 = vunpack.c.l.b16 %v750
      %v822 = vunpack.c.l.b16 %v751
      %v823 = vunpack.c.l.b16 %v752
      %v824 = vunpack.c.l.b16 %v753
      %v825 = vunpack.c.l.b16 %v754
      %v826 = vunpack.c.l.b16 %v755
      %v827 = vunpack.c.l.b16 %v756
      %v828 = vpack.c.b16 %v821, %v820
      %v829 = vpack.c.b16 %v823, %v822
      %v830 = vpack.c.b16 %v825, %v824
      %v831 = vpack.c.b16 %v827, %v826
      %v837 = vsel %vm734, %v748, 0
      %839 = vmatpush.bf16.msra.mxu0 0
      %840 = vmatpush.bf16.msra.mxu0 0
      %841 = vmatpush.bf16.msra.mxu0 0
      %842 = vmatpush.bf16.msra.mxu0 0
      %843 = vmatpush.bf16.msra.mxu0 %v831
      %844 = vmatpush.bf16.msra.mxu0 %v830
      %845 = vmatpush.bf16.msra.mxu0 %v829
      %846 = vmatpush.bf16.msra.mxu0 %v828
      %847 = vmatmul.bf16.gmra.mxu0 %v837
      %v848 = vpop.f32.mrf.mxu0
      %v849 = vadd.f32 %v808, %v848
      %v850 = vpop.f32.mrf.mxu0
      %v851 = vadd.f32 %v810, %v850
      %852 = vdwg.mxu0
      %s853 = scalar_lea.vmem [#allocation2], 2
      %v854 = vld [vmem:[%s853] ss:$2 sm:$0xff]
      %s855 = scalar_lea.vmem [#allocation2], 18
      %v856 = vld [vmem:[%s855] ss:$2 sm:$0xff]
      %v857 = vpack.c.bf16 %v856, %v854
      %s858 = scalar_lea.vmem %s2, 64
      %v859 = vld [vmem:[%s858] sm:$0xf]
      %v860 = vld [vmem:[%s858 + $0x4] sm:$0xf]
      %v861 = vld [vmem:[%s858 + $0x8] sm:$0xf]
      %v862 = vld [vmem:[%s858 + $0xc] sm:$0xf]
      %v863 = vld [vmem:[%s858 + $0x10] sm:$0xf]
      %v864 = vld [vmem:[%s858 + $0x14] sm:$0xf]
      %v865 = vld [vmem:[%s858 + $0x18] sm:$0xf]
      %v866 = vld [vmem:[%s858 + $0x1c] sm:$0xf]
      %v875 = vunpack.c.l.b16 %v859
      %v876 = vunpack.c.l.b16 %v860
      %v877 = vunpack.c.l.b16 %v861
      %v878 = vunpack.c.l.b16 %v862
      %v879 = vunpack.c.l.b16 %v863
      %v880 = vunpack.c.l.b16 %v864
      %v881 = vunpack.c.l.b16 %v865
      %v882 = vunpack.c.l.b16 %v866
      %v883 = vpack.c.b16 %v876, %v875
      %v884 = vpack.c.b16 %v878, %v877
      %v885 = vpack.c.b16 %v880, %v879
      %v886 = vpack.c.b16 %v882, %v881
      %v892 = vsel %vm734, %v857, 0
      %894 = vmatpush.bf16.msra.mxu0 0
      %895 = vmatpush.bf16.msra.mxu0 0
      %896 = vmatpush.bf16.msra.mxu0 0
      %897 = vmatpush.bf16.msra.mxu0 0
      %898 = vmatpush.bf16.msra.mxu0 %v886
      %899 = vmatpush.bf16.msra.mxu0 %v885
      %900 = vmatpush.bf16.msra.mxu0 %v884
      %901 = vmatpush.bf16.msra.mxu0 %v883
      %902 = vmatmul.bf16.gmra.mxu0 %v892
      %v903 = vpop.f32.mrf.mxu0
      %v904 = vadd.f32 0.0, %v903
      %v905 = vpop.f32.mrf.mxu0
      %v906 = vadd.f32 0.0, %v905
      %907 = vdwg.mxu0
      %v908 = vadd.f32 %v849, %v904
      %v909 = vadd.f32 %v851, %v906
      %s910 = scalar_lea.vmem [#allocation2], 3
      %v911 = vld [vmem:[%s910] ss:$2 sm:$0xff]
      %s912 = scalar_lea.vmem [#allocation2], 19
      %v913 = vld [vmem:[%s912] ss:$2 sm:$0xff]
      %v914 = vpack.c.bf16 %v913, %v911
      %s915 = scalar_lea.vmem %s2, 96
      %v916 = vld [vmem:[%s915] sm:$0xf]
      %v917 = vld [vmem:[%s915 + $0x4] sm:$0xf]
      %v918 = vld [vmem:[%s915 + $0x8] sm:$0xf]
      %v919 = vld [vmem:[%s915 + $0xc] sm:$0xf]
      %v920 = vld [vmem:[%s915 + $0x10] sm:$0xf]
      %v921 = vld [vmem:[%s915 + $0x14] sm:$0xf]
      %v922 = vld [vmem:[%s915 + $0x18] sm:$0xf]
      %v923 = vld [vmem:[%s915 + $0x1c] sm:$0xf]
      %v932 = vunpack.c.l.b16 %v916
      %v933 = vunpack.c.l.b16 %v917
      %v934 = vunpack.c.l.b16 %v918
      %v935 = vunpack.c.l.b16 %v919
      %v936 = vunpack.c.l.b16 %v920
      %v937 = vunpack.c.l.b16 %v921
      %v938 = vunpack.c.l.b16 %v922
      %v939 = vunpack.c.l.b16 %v923
      %v940 = vpack.c.b16 %v933, %v932
      %v941 = vpack.c.b16 %v935, %v934
      %v942 = vpack.c.b16 %v937, %v936
      %v943 = vpack.c.b16 %v939, %v938
      %v949 = vsel %vm734, %v914, 0
      %951 = vmatpush.bf16.msra.mxu0 0
      %952 = vmatpush.bf16.msra.mxu0 0
      %953 = vmatpush.bf16.msra.mxu0 0
      %954 = vmatpush.bf16.msra.mxu0 0
      %955 = vmatpush.bf16.msra.mxu0 %v943
      %956 = vmatpush.bf16.msra.mxu0 %v942
      %957 = vmatpush.bf16.msra.mxu0 %v941
      %958 = vmatpush.bf16.msra.mxu0 %v940
      %959 = vmatmul.bf16.gmra.mxu0 %v949
      %v960 = vpop.f32.mrf.mxu0
      %v961 = vadd.f32 0.0, %v960
      %v962 = vpop.f32.mrf.mxu0
      %v963 = vadd.f32 0.0, %v962
      %964 = vdwg.mxu0
      %v965 = vadd.f32 %v908, %v961
      %v966 = vadd.f32 %v909, %v963
      %v967 = vld [vmem:[%s6] sm:$0x1]
      %v969 = vperm.slane %v967, 0
      %v971 = vadd.f32 %v965, %v969
      %v972 = vadd.f32 %v966, %v969
      %v973 = vadd.f32 %v971, %v972
      %v974 = vrot.slane %v973, 4
      %v975 = vadd.f32 %v973, %v974
      %v976 = vrot.slane %v975, 2
      %v977 = vadd.f32 %v975, %v976
      %v978 = vrot.slane %v977, 1
      %v979 = vadd.f32 %v977, %v978
      %v980 = vmul.f32 %v971, %v971
      %v981 = vmul.f32 %v972, %v972
      %v982 = vadd.f32 %v980, %v981
      %v983 = vrot.slane %v982, 4
      %v984 = vadd.f32 %v982, %v983
      %v985 = vrot.slane %v984, 2
      %v986 = vadd.f32 %v984, %v985
      %v987 = vrot.slane %v986, 1
      %v988 = vadd.f32 %v986, %v987
      %v989 = vmul.f32 %v979, 0.0625
      %v990 = vmul.f32 %v988, 0.0625
      %v991 = vmul.f32 %v989, %v989
      %v992 = vsub.f32 %v990, %v991
      %v993 = vsub.f32 %v971, %v989
      %v994 = vsub.f32 %v972, %v989
      %v995 = vadd.f32 %v992, 1e-05
      %v996 = vrsqrt.pop %v995
      %v997 = vmul.f32 %v996, %v995
      %v998 = vmul.f32 %v997, %v996
      %v999 = vmul.f32 0.5, %v998
      %v1000 = vsub.f32 1.5, %v999
      %v1001 = vmul.f32 %v996, %v1000
      %vm1002 = vweird.f32 %v995
      %vm1003 = vweird.f32 %v996
      %vm1004 = vmor %vm1002, %vm1003
      %v1005 = vsel %vm1004, %v996, %v1001
      %v1006 = vmul.f32 %v993, %v1005
      %v1007 = vmul.f32 %v994, %v1005
      %vm1008 = vcmp.gt.f32.partialorder %v1006, 0.0
      %vm1009 = vcmp.gt.f32.partialorder %v1007, 0.0
      %v1010 = vmul.f32 %v1006, 0.2
      %v1011 = vmul.f32 %v1007, 0.2
      %v1012 = vsel %vm1008, %v1006, %v1010
      %v1013 = vsel %vm1009, %v1007, %v1011
      %1014 = vst [vmem:[#allocation3] sm:$0xff] 0.0
      %1015 = vst [vmem:[#allocation3 + $0x8] sm:$0xff] 0.0
      %1016 = vst [vmem:[#allocation3 + $0x10] sm:$0x3] 0.0
      %1017 = vst [vmem:[#allocation3 + $0x1] sm:$0xff] %v1012
      %1018 = vst [vmem:[#allocation3 + $0x9] sm:$0xff] %v1013
      %v1019 = vld [vmem:[#allocation3] ss:$2 sm:$0xff]
      %v1020 = vpack.c.bf16 %v1019, %v1019
      %v1021 = vld [vmem:[%s3] sm:$0xff]
      %v1022 = vld [vmem:[%s3 + $0x8] sm:$0xff]
      %v1023 = vld [vmem:[%s3 + $0x10] sm:$0xff]
      %v1024 = vld [vmem:[%s3 + $0x18] sm:$0xff]
      %v1025 = vld [vmem:[%s3 + $0x20] sm:$0xff]
      %v1026 = vld [vmem:[%s3 + $0x28] sm:$0xff]
      %v1027 = vld [vmem:[%s3 + $0x30] sm:$0xff]
      %v1028 = vld [vmem:[%s3 + $0x38] sm:$0xff]
      %v1029 = vld [vmem:[%s3 + $0x40] sm:$0xff]
      %v1030 = vld [vmem:[%s3 + $0x48] sm:$0xff]
      %v1031 = vld [vmem:[%s3 + $0x50] sm:$0xff]
      %v1032 = vld [vmem:[%s3 + $0x58] sm:$0xff]
      %v1033 = vld [vmem:[%s3 + $0x60] sm:$0xff]
      %v1034 = vld [vmem:[%s3 + $0x68] sm:$0xff]
      %v1035 = vld [vmem:[%s3 + $0x70] sm:$0xff]
      %v1036 = vld [vmem:[%s3 + $0x78] sm:$0xff]
      %s1037 = scalar_lea.vmem [#allocation3], 1
      %v1038 = vld [vmem:[%s1037] ss:$2 sm:$0xff]
      %v1039 = vpack.c.bf16 %v1038, %v1038
      %s1040 = scalar_lea.vmem %s3, 128
      %v1041 = vld [vmem:[%s1040] sm:$0xff]
      %v1042 = vld [vmem:[%s1040 + $0x8] sm:$0xff]
      %v1043 = vld [vmem:[%s1040 + $0x10] sm:$0xff]
      %v1044 = vld [vmem:[%s1040 + $0x18] sm:$0xff]
      %v1045 = vld [vmem:[%s1040 + $0x20] sm:$0xff]
      %v1046 = vld [vmem:[%s1040 + $0x28] sm:$0xff]
      %v1047 = vld [vmem:[%s1040 + $0x30] sm:$0xff]
      %v1048 = vld [vmem:[%s1040 + $0x38] sm:$0xff]
      %v1049 = vld [vmem:[%s1040 + $0x40] sm:$0xff]
      %v1050 = vld [vmem:[%s1040 + $0x48] sm:$0xff]
      %v1051 = vld [vmem:[%s1040 + $0x50] sm:$0xff]
      %v1052 = vld [vmem:[%s1040 + $0x58] sm:$0xff]
      %v1053 = vld [vmem:[%s1040 + $0x60] sm:$0xff]
      %v1054 = vld [vmem:[%s1040 + $0x68] sm:$0xff]
      %v1055 = vld [vmem:[%s1040 + $0x70] sm:$0xff]
      %v1056 = vld [vmem:[%s1040 + $0x78] sm:$0xff]
      %v1073 = vunpack.c.l.b16 %v1041
      %v1074 = vunpack.c.h.b16 %v1041
      %v1075 = vunpack.c.l.b16 %v1042
      %v1076 = vunpack.c.h.b16 %v1042
      %v1077 = vunpack.c.l.b16 %v1043
      %v1078 = vunpack.c.h.b16 %v1043
      %v1079 = vunpack.c.l.b16 %v1044
      %v1080 = vunpack.c.h.b16 %v1044
      %v1081 = vunpack.c.l.b16 %v1045
      %v1082 = vunpack.c.h.b16 %v1045
      %v1083 = vunpack.c.l.b16 %v1046
      %v1084 = vunpack.c.h.b16 %v1046
      %v1085 = vunpack.c.l.b16 %v1047
      %v1086 = vunpack.c.h.b16 %v1047
      %v1087 = vunpack.c.l.b16 %v1048
      %v1088 = vunpack.c.h.b16 %v1048
      %v1089 = vunpack.c.l.b16 %v1049
      %v1090 = vunpack.c.h.b16 %v1049
      %v1091 = vunpack.c.l.b16 %v1050
      %v1092 = vunpack.c.h.b16 %v1050
      %v1093 = vunpack.c.l.b16 %v1051
      %v1094 = vunpack.c.h.b16 %v1051
      %v1095 = vunpack.c.l.b16 %v1052
      %v1096 = vunpack.c.h.b16 %v1052
      %v1097 = vunpack.c.l.b16 %v1053
      %v1098 = vunpack.c.h.b16 %v1053
      %v1099 = vunpack.c.l.b16 %v1054
      %v1100 = vunpack.c.h.b16 %v1054
      %v1101 = vunpack.c.l.b16 %v1055
      %v1102 = vunpack.c.h.b16 %v1055
      %v1103 = vunpack.c.l.b16 %v1056
      %v1104 = vunpack.c.h.b16 %v1056
      %v1105 = vpack.c.b16 %v1075, %v1073
      %v1106 = vpack.c.b16 %v1076, %v1074
      %v1107 = vpack.c.b16 %v1079, %v1077
      %v1108 = vpack.c.b16 %v1080, %v1078
      %v1109 = vpack.c.b16 %v1083, %v1081
      %v1110 = vpack.c.b16 %v1084, %v1082
      %v1111 = vpack.c.b16 %v1087, %v1085
      %v1112 = vpack.c.b16 %v1088, %v1086
      %v1113 = vpack.c.b16 %v1091, %v1089
      %v1114 = vpack.c.b16 %v1092, %v1090
      %v1115 = vpack.c.b16 %v1095, %v1093
      %v1116 = vpack.c.b16 %v1096, %v1094
      %v1117 = vpack.c.b16 %v1099, %v1097
      %v1118 = vpack.c.b16 %v1100, %v1098
      %v1119 = vpack.c.b16 %v1103, %v1101
      %v1120 = vpack.c.b16 %v1104, %v1102
      %1137 = vmatpush.bf16.msra.mxu0 %v1119
      %1138 = vmatpush.bf16.msra.mxu0 %v1117
      %1139 = vmatpush.bf16.msra.mxu0 %v1115
      %1140 = vmatpush.bf16.msra.mxu0 %v1113
      %1141 = vmatpush.bf16.msra.mxu0 %v1111
      %1142 = vmatpush.bf16.msra.mxu0 %v1109
      %1143 = vmatpush.bf16.msra.mxu0 %v1107
      %1144 = vmatpush.bf16.msra.mxu0 %v1105
      %1145 = vmatmul.bf16.gmra.mxu0 %v1039
      %v1146 = vpop.f32.mrf.mxu0
      %v1147 = vadd.f32 0.0, %v1146
      %v1148 = vpop.f32.mrf.mxu0
      %1149 = vdwg.mxu0
      %1150 = vmatpush.bf16.msra.mxu0 %v1120
      %1151 = vmatpush.bf16.msra.mxu0 %v1118
      %1152 = vmatpush.bf16.msra.mxu0 %v1116
      %1153 = vmatpush.bf16.msra.mxu0 %v1114
      %1154 = vmatpush.bf16.msra.mxu0 %v1112
      %1155 = vmatpush.bf16.msra.mxu0 %v1110
      %1156 = vmatpush.bf16.msra.mxu0 %v1108
      %1157 = vmatpush.bf16.msra.mxu0 %v1106
      %1158 = vmatmul.bf16.gmra.mxu0 %v1039
      %v1159 = vpop.f32.mrf.mxu0
      %v1160 = vadd.f32 0.0, %v1159
      %v1161 = vpop.f32.mrf.mxu0
      %1162 = vdwg.mxu0
      %v1179 = vunpack.c.l.b16 %v1021
      %v1180 = vunpack.c.h.b16 %v1021
      %v1181 = vunpack.c.l.b16 %v1022
      %v1182 = vunpack.c.h.b16 %v1022
      %v1183 = vunpack.c.l.b16 %v1023
      %v1184 = vunpack.c.h.b16 %v1023
      %v1185 = vunpack.c.l.b16 %v1024
      %v1186 = vunpack.c.h.b16 %v1024
      %v1187 = vunpack.c.l.b16 %v1025
      %v1188 = vunpack.c.h.b16 %v1025
      %v1189 = vunpack.c.l.b16 %v1026
      %v1190 = vunpack.c.h.b16 %v1026
      %v1191 = vunpack.c.l.b16 %v1027
      %v1192 = vunpack.c.h.b16 %v1027
      %v1193 = vunpack.c.l.b16 %v1028
      %v1194 = vunpack.c.h.b16 %v1028
      %v1195 = vunpack.c.l.b16 %v1029
      %v1196 = vunpack.c.h.b16 %v1029
      %v1197 = vunpack.c.l.b16 %v1030
      %v1198 = vunpack.c.h.b16 %v1030
      %v1199 = vunpack.c.l.b16 %v1031
      %v1200 = vunpack.c.h.b16 %v1031
      %v1201 = vunpack.c.l.b16 %v1032
      %v1202 = vunpack.c.h.b16 %v1032
      %v1203 = vunpack.c.l.b16 %v1033
      %v1204 = vunpack.c.h.b16 %v1033
      %v1205 = vunpack.c.l.b16 %v1034
      %v1206 = vunpack.c.h.b16 %v1034
      %v1207 = vunpack.c.l.b16 %v1035
      %v1208 = vunpack.c.h.b16 %v1035
      %v1209 = vunpack.c.l.b16 %v1036
      %v1210 = vunpack.c.h.b16 %v1036
      %v1211 = vpack.c.b16 %v1181, %v1179
      %v1212 = vpack.c.b16 %v1182, %v1180
      %v1213 = vpack.c.b16 %v1185, %v1183
      %v1214 = vpack.c.b16 %v1186, %v1184
      %v1215 = vpack.c.b16 %v1189, %v1187
      %v1216 = vpack.c.b16 %v1190, %v1188
      %v1217 = vpack.c.b16 %v1193, %v1191
      %v1218 = vpack.c.b16 %v1194, %v1192
      %v1219 = vpack.c.b16 %v1197, %v1195
      %v1220 = vpack.c.b16 %v1198, %v1196
      %v1221 = vpack.c.b16 %v1201, %v1199
      %v1222 = vpack.c.b16 %v1202, %v1200
      %v1223 = vpack.c.b16 %v1205, %v1203
      %v1224 = vpack.c.b16 %v1206, %v1204
      %v1225 = vpack.c.b16 %v1209, %v1207
      %v1226 = vpack.c.b16 %v1210, %v1208
      %1243 = vmatpush.bf16.msra.mxu0 %v1225
      %1244 = vmatpush.bf16.msra.mxu0 %v1223
      %1245 = vmatpush.bf16.msra.mxu0 %v1221
      %1246 = vmatpush.bf16.msra.mxu0 %v1219
      %1247 = vmatpush.bf16.msra.mxu0 %v1217
      %1248 = vmatpush.bf16.msra.mxu0 %v1215
      %1249 = vmatpush.bf16.msra.mxu0 %v1213
      %1250 = vmatpush.bf16.msra.mxu0 %v1211
      %1251 = vmatmul.bf16.gmra.mxu0 %v1020
      %v1252 = vpop.f32.mrf.mxu0
      %v1253 = vadd.f32 %v1147, %v1252
      %v1254 = vpop.f32.mrf.mxu0
      %1255 = vdwg.mxu0
      %1256 = vmatpush.bf16.msra.mxu0 %v1226
      %1257 = vmatpush.bf16.msra.mxu0 %v1224
      %1258 = vmatpush.bf16.msra.mxu0 %v1222
      %1259 = vmatpush.bf16.msra.mxu0 %v1220
      %1260 = vmatpush.bf16.msra.mxu0 %v1218
      %1261 = vmatpush.bf16.msra.mxu0 %v1216
      %1262 = vmatpush.bf16.msra.mxu0 %v1214
      %1263 = vmatpush.bf16.msra.mxu0 %v1212
      %1264 = vmatmul.bf16.gmra.mxu0 %v1020
      %v1265 = vpop.f32.mrf.mxu0
      %v1266 = vadd.f32 %v1160, %v1265
      %v1267 = vpop.f32.mrf.mxu0
      %1268 = vdwg.mxu0
      %s1269 = scalar_lea.vmem [#allocation3], 2
      %v1270 = vld [vmem:[%s1269] ss:$2 sm:$0xff]
      %v1271 = vpack.c.bf16 %v1270, %v1270
      %s1272 = scalar_lea.vmem %s3, 256
      %v1273 = vld [vmem:[%s1272] sm:$0xff]
      %v1274 = vld [vmem:[%s1272 + $0x8] sm:$0xff]
      %v1275 = vld [vmem:[%s1272 + $0x10] sm:$0xff]
      %v1276 = vld [vmem:[%s1272 + $0x18] sm:$0xff]
      %v1277 = vld [vmem:[%s1272 + $0x20] sm:$0xff]
      %v1278 = vld [vmem:[%s1272 + $0x28] sm:$0xff]
      %v1279 = vld [vmem:[%s1272 + $0x30] sm:$0xff]
      %v1280 = vld [vmem:[%s1272 + $0x38] sm:$0xff]
      %v1281 = vld [vmem:[%s1272 + $0x40] sm:$0xff]
      %v1282 = vld [vmem:[%s1272 + $0x48] sm:$0xff]
      %v1283 = vld [vmem:[%s1272 + $0x50] sm:$0xff]
      %v1284 = vld [vmem:[%s1272 + $0x58] sm:$0xff]
      %v1285 = vld [vmem:[%s1272 + $0x60] sm:$0xff]
      %v1286 = vld [vmem:[%s1272 + $0x68] sm:$0xff]
      %v1287 = vld [vmem:[%s1272 + $0x70] sm:$0xff]
      %v1288 = vld [vmem:[%s1272 + $0x78] sm:$0xff]
      %v1305 = vunpack.c.l.b16 %v1273
      %v1306 = vunpack.c.h.b16 %v1273
      %v1307 = vunpack.c.l.b16 %v1274
      %v1308 = vunpack.c.h.b16 %v1274
      %v1309 = vunpack.c.l.b16 %v1275
      %v1310 = vunpack.c.h.b16 %v1275
      %v1311 = vunpack.c.l.b16 %v1276
      %v1312 = vunpack.c.h.b16 %v1276
      %v1313 = vunpack.c.l.b16 %v1277
      %v1314 = vunpack.c.h.b16 %v1277
      %v1315 = vunpack.c.l.b16 %v1278
      %v1316 = vunpack.c.h.b16 %v1278
      %v1317 = vunpack.c.l.b16 %v1279
      %v1318 = vunpack.c.h.b16 %v1279
      %v1319 = vunpack.c.l.b16 %v1280
      %v1320 = vunpack.c.h.b16 %v1280
      %v1321 = vunpack.c.l.b16 %v1281
      %v1322 = vunpack.c.h.b16 %v1281
      %v1323 = vunpack.c.l.b16 %v1282
      %v1324 = vunpack.c.h.b16 %v1282
      %v1325 = vunpack.c.l.b16 %v1283
      %v1326 = vunpack.c.h.b16 %v1283
      %v1327 = vunpack.c.l.b16 %v1284
      %v1328 = vunpack.c.h.b16 %v1284
      %v1329 = vunpack.c.l.b16 %v1285
      %v1330 = vunpack.c.h.b16 %v1285
      %v1331 = vunpack.c.l.b16 %v1286
      %v1332 = vunpack.c.h.b16 %v1286
      %v1333 = vunpack.c.l.b16 %v1287
      %v1334 = vunpack.c.h.b16 %v1287
      %v1335 = vunpack.c.l.b16 %v1288
      %v1336 = vunpack.c.h.b16 %v1288
      %v1337 = vpack.c.b16 %v1307, %v1305
      %v1338 = vpack.c.b16 %v1308, %v1306
      %v1339 = vpack.c.b16 %v1311, %v1309
      %v1340 = vpack.c.b16 %v1312, %v1310
      %v1341 = vpack.c.b16 %v1315, %v1313
      %v1342 = vpack.c.b16 %v1316, %v1314
      %v1343 = vpack.c.b16 %v1319, %v1317
      %v1344 = vpack.c.b16 %v1320, %v1318
      %v1345 = vpack.c.b16 %v1323, %v1321
      %v1346 = vpack.c.b16 %v1324, %v1322
      %v1347 = vpack.c.b16 %v1327, %v1325
      %v1348 = vpack.c.b16 %v1328, %v1326
      %v1349 = vpack.c.b16 %v1331, %v1329
      %v1350 = vpack.c.b16 %v1332, %v1330
      %v1351 = vpack.c.b16 %v1335, %v1333
      %v1352 = vpack.c.b16 %v1336, %v1334
      %1369 = vmatpush.bf16.msra.mxu0 %v1351
      %1370 = vmatpush.bf16.msra.mxu0 %v1349
      %1371 = vmatpush.bf16.msra.mxu0 %v1347
      %1372 = vmatpush.bf16.msra.mxu0 %v1345
      %1373 = vmatpush.bf16.msra.mxu0 %v1343
      %1374 = vmatpush.bf16.msra.mxu0 %v1341
      %1375 = vmatpush.bf16.msra.mxu0 %v1339
      %1376 = vmatpush.bf16.msra.mxu0 %v1337
      %1377 = vmatmul.bf16.gmra.mxu0 %v1271
      %v1378 = vpop.f32.mrf.mxu0
      %v1379 = vadd.f32 0.0, %v1378
      %v1380 = vpop.f32.mrf.mxu0
      %1381 = vdwg.mxu0
      %1382 = vmatpush.bf16.msra.mxu0 %v1352
      %1383 = vmatpush.bf16.msra.mxu0 %v1350
      %1384 = vmatpush.bf16.msra.mxu0 %v1348
      %1385 = vmatpush.bf16.msra.mxu0 %v1346
      %1386 = vmatpush.bf16.msra.mxu0 %v1344
      %1387 = vmatpush.bf16.msra.mxu0 %v1342
      %1388 = vmatpush.bf16.msra.mxu0 %v1340
      %1389 = vmatpush.bf16.msra.mxu0 %v1338
      %1390 = vmatmul.bf16.gmra.mxu0 %v1271
      %v1391 = vpop.f32.mrf.mxu0
      %v1392 = vadd.f32 0.0, %v1391
      %v1393 = vpop.f32.mrf.mxu0
      %1394 = vdwg.mxu0
      %v1395 = vadd.f32 %v1253, %v1379
      %v1396 = vadd.f32 %v1266, %v1392
      %s1397 = scalar_lea.vmem [#allocation3], 3
      %v1398 = vld [vmem:[%s1397] ss:$2 sm:$0xff]
      %v1399 = vpack.c.bf16 %v1398, %v1398
      %s1400 = scalar_lea.vmem %s3, 384
      %v1401 = vld [vmem:[%s1400] sm:$0xff]
      %v1402 = vld [vmem:[%s1400 + $0x8] sm:$0xff]
      %v1403 = vld [vmem:[%s1400 + $0x10] sm:$0xff]
      %v1404 = vld [vmem:[%s1400 + $0x18] sm:$0xff]
      %v1405 = vld [vmem:[%s1400 + $0x20] sm:$0xff]
      %v1406 = vld [vmem:[%s1400 + $0x28] sm:$0xff]
      %v1407 = vld [vmem:[%s1400 + $0x30] sm:$0xff]
      %v1408 = vld [vmem:[%s1400 + $0x38] sm:$0xff]
      %v1409 = vld [vmem:[%s1400 + $0x40] sm:$0xff]
      %v1410 = vld [vmem:[%s1400 + $0x48] sm:$0xff]
      %v1411 = vld [vmem:[%s1400 + $0x50] sm:$0xff]
      %v1412 = vld [vmem:[%s1400 + $0x58] sm:$0xff]
      %v1413 = vld [vmem:[%s1400 + $0x60] sm:$0xff]
      %v1414 = vld [vmem:[%s1400 + $0x68] sm:$0xff]
      %v1415 = vld [vmem:[%s1400 + $0x70] sm:$0xff]
      %v1416 = vld [vmem:[%s1400 + $0x78] sm:$0xff]
      %v1433 = vunpack.c.l.b16 %v1401
      %v1434 = vunpack.c.h.b16 %v1401
      %v1435 = vunpack.c.l.b16 %v1402
      %v1436 = vunpack.c.h.b16 %v1402
      %v1437 = vunpack.c.l.b16 %v1403
      %v1438 = vunpack.c.h.b16 %v1403
      %v1439 = vunpack.c.l.b16 %v1404
      %v1440 = vunpack.c.h.b16 %v1404
      %v1441 = vunpack.c.l.b16 %v1405
      %v1442 = vunpack.c.h.b16 %v1405
      %v1443 = vunpack.c.l.b16 %v1406
      %v1444 = vunpack.c.h.b16 %v1406
      %v1445 = vunpack.c.l.b16 %v1407
      %v1446 = vunpack.c.h.b16 %v1407
      %v1447 = vunpack.c.l.b16 %v1408
      %v1448 = vunpack.c.h.b16 %v1408
      %v1449 = vunpack.c.l.b16 %v1409
      %v1450 = vunpack.c.h.b16 %v1409
      %v1451 = vunpack.c.l.b16 %v1410
      %v1452 = vunpack.c.h.b16 %v1410
      %v1453 = vunpack.c.l.b16 %v1411
      %v1454 = vunpack.c.h.b16 %v1411
      %v1455 = vunpack.c.l.b16 %v1412
      %v1456 = vunpack.c.h.b16 %v1412
      %v1457 = vunpack.c.l.b16 %v1413
      %v1458 = vunpack.c.h.b16 %v1413
      %v1459 = vunpack.c.l.b16 %v1414
      %v1460 = vunpack.c.h.b16 %v1414
      %v1461 = vunpack.c.l.b16 %v1415
      %v1462 = vunpack.c.h.b16 %v1415
      %v1463 = vunpack.c.l.b16 %v1416
      %v1464 = vunpack.c.h.b16 %v1416
      %v1465 = vpack.c.b16 %v1435, %v1433
      %v1466 = vpack.c.b16 %v1436, %v1434
      %v1467 = vpack.c.b16 %v1439, %v1437
      %v1468 = vpack.c.b16 %v1440, %v1438
      %v1469 = vpack.c.b16 %v1443, %v1441
      %v1470 = vpack.c.b16 %v1444, %v1442
      %v1471 = vpack.c.b16 %v1447, %v1445
      %v1472 = vpack.c.b16 %v1448, %v1446
      %v1473 = vpack.c.b16 %v1451, %v1449
      %v1474 = vpack.c.b16 %v1452, %v1450
      %v1475 = vpack.c.b16 %v1455, %v1453
      %v1476 = vpack.c.b16 %v1456, %v1454
      %v1477 = vpack.c.b16 %v1459, %v1457
      %v1478 = vpack.c.b16 %v1460, %v1458
      %v1479 = vpack.c.b16 %v1463, %v1461
      %v1480 = vpack.c.b16 %v1464, %v1462
      %1497 = vmatpush.bf16.msra.mxu0 %v1479
      %1498 = vmatpush.bf16.msra.mxu0 %v1477
      %1499 = vmatpush.bf16.msra.mxu0 %v1475
      %1500 = vmatpush.bf16.msra.mxu0 %v1473
      %1501 = vmatpush.bf16.msra.mxu0 %v1471
      %1502 = vmatpush.bf16.msra.mxu0 %v1469
      %1503 = vmatpush.bf16.msra.mxu0 %v1467
      %1504 = vmatpush.bf16.msra.mxu0 %v1465
      %1505 = vmatmul.bf16.gmra.mxu0 %v1399
      %v1506 = vpop.f32.mrf.mxu0
      %v1507 = vadd.f32 0.0, %v1506
      %v1508 = vpop.f32.mrf.mxu0
      %1509 = vdwg.mxu0
      %1510 = vmatpush.bf16.msra.mxu0 %v1480
      %1511 = vmatpush.bf16.msra.mxu0 %v1478
      %1512 = vmatpush.bf16.msra.mxu0 %v1476
      %1513 = vmatpush.bf16.msra.mxu0 %v1474
      %1514 = vmatpush.bf16.msra.mxu0 %v1472
      %1515 = vmatpush.bf16.msra.mxu0 %v1470
      %1516 = vmatpush.bf16.msra.mxu0 %v1468
      %1517 = vmatpush.bf16.msra.mxu0 %v1466
      %1518 = vmatmul.bf16.gmra.mxu0 %v1399
      %v1519 = vpop.f32.mrf.mxu0
      %v1520 = vadd.f32 0.0, %v1519
      %v1521 = vpop.f32.mrf.mxu0
      %1522 = vdwg.mxu0
      %v1523 = vadd.f32 %v1395, %v1507
      %v1524 = vadd.f32 %v1396, %v1520
      %v1525 = vld [vmem:[%s7] sm:$0x3]
      %v1527 = vperm.slane %v1525, 0
      %v1528 = vperm.slane %v1525, 1
      %v1531 = vadd.f32 %v1523, %v1527
      %v1532 = vadd.f32 %v1524, %v1528
      %v1533 = vrot.slane %v1531, 4
      %v1534 = vadd.f32 %v1531, %v1533
      %v1535 = vrot.slane %v1534, 2
      %v1536 = vadd.f32 %v1534, %v1535
      %v1537 = vrot.slane %v1536, 1
      %v1538 = vadd.f32 %v1536, %v1537
      %v1539 = vrot.slane %v1532, 4
      %v1540 = vadd.f32 %v1532, %v1539
      %v1541 = vrot.slane %v1540, 2
      %v1542 = vadd.f32 %v1540, %v1541
      %v1543 = vrot.slane %v1542, 1
      %v1544 = vadd.f32 %v1542, %v1543
      %v1545 = vmul.f32 %v1531, %v1531
      %v1546 = vmul.f32 %v1532, %v1532
      %v1547 = vrot.slane %v1545, 4
      %v1548 = vadd.f32 %v1545, %v1547
      %v1549 = vrot.slane %v1548, 2
      %v1550 = vadd.f32 %v1548, %v1549
      %v1551 = vrot.slane %v1550, 1
      %v1552 = vadd.f32 %v1550, %v1551
      %v1553 = vrot.slane %v1546, 4
      %v1554 = vadd.f32 %v1546, %v1553
      %v1555 = vrot.slane %v1554, 2
      %v1556 = vadd.f32 %v1554, %v1555
      %v1557 = vrot.slane %v1556, 1
      %v1558 = vadd.f32 %v1556, %v1557
      %v1559 = vmul.f32 %v1538, 0.125
      %v1560 = vmul.f32 %v1544, 0.125
      %v1561 = vmul.f32 %v1552, 0.125
      %v1562 = vmul.f32 %v1558, 0.125
      %v1563 = vmul.f32 %v1559, %v1559
      %v1564 = vmul.f32 %v1560, %v1560
      %v1565 = vsub.f32 %v1561, %v1563
      %v1566 = vsub.f32 %v1562, %v1564
      %v1567 = vsub.f32 %v1531, %v1559
      %v1568 = vsub.f32 %v1532, %v1560
      %v1569 = vadd.f32 %v1565, 1e-05
      %v1570 = vadd.f32 %v1566, 1e-05
      %v1571 = vrsqrt.pop %v1569
      %v1572 = vmul.f32 %v1571, %v1569
      %v1573 = vmul.f32 %v1572, %v1571
      %v1574 = vmul.f32 0.5, %v1573
      %v1575 = vsub.f32 1.5, %v1574
      %v1576 = vmul.f32 %v1571, %v1575
      %vm1577 = vweird.f32 %v1569
      %vm1578 = vweird.f32 %v1571
      %vm1579 = vmor %vm1577, %vm1578
      %v1580 = vsel %vm1579, %v1571, %v1576
      %v1581 = vrsqrt.pop %v1570
      %v1582 = vmul.f32 %v1581, %v1570
      %v1583 = vmul.f32 %v1582, %v1581
      %v1584 = vmul.f32 0.5, %v1583
      %v1585 = vsub.f32 1.5, %v1584
      %v1586 = vmul.f32 %v1581, %v1585
      %vm1587 = vweird.f32 %v1570
      %vm1588 = vweird.f32 %v1581
      %vm1589 = vmor %vm1587, %vm1588
      %v1590 = vsel %vm1589, %v1581, %v1586
      %v1591 = vmul.f32 %v1567, %v1580
      %v1592 = vmul.f32 %v1568, %v1590
      %vm1593 = vcmp.gt.f32.partialorder %v1591, 0.0
      %vm1594 = vcmp.gt.f32.partialorder %v1592, 0.0
      %v1595 = vmul.f32 %v1591, 0.2
      %v1596 = vmul.f32 %v1592, 0.2
      %v1597 = vsel %vm1593, %v1591, %v1595
      %v1598 = vsel %vm1594, %v1592, %v1596
      %1599 = vst [vmem:[#allocation4] sm:$0xff] 0.0
      %1600 = vst [vmem:[#allocation4 + $0x8] sm:$0xff] 0.0
      %1601 = vst [vmem:[#allocation4 + $0x10] sm:$0x7] 0.0
      %1602 = vst [vmem:[#allocation4 + $0x18] sm:$0x7] 0.0
      %v1605 = vrot.slane %v1597, 7
      %v1606 = vrot.slane %v1598, 7
      %1609 = vst [vmem:[#allocation4] sm:$0xfe] %v1605
      %1610 = vst [vmem:[#allocation4 + $0x8] sm:$0xfe] %v1606
      %1611 = vst [vmem:[#allocation4 + $0x10] sm:$0x1] %v1605
      %1612 = vst [vmem:[#allocation4 + $0x18] sm:$0x1] %v1606
      %v1613 = vld [vmem:[#allocation4] sm:$0xff]
      %v1614 = vld [vmem:[#allocation4 + $0x8] sm:$0xff]
      %v1615 = vpack.c.bf16 %v1613, %v1613
      %v1616 = vpack.c.bf16 %v1614, %v1614
      %v1617 = vld [vmem:[%s4] sm:$0xf]
      %v1618 = vld [vmem:[%s4 + $0x4] sm:$0xf]
      %v1619 = vld [vmem:[%s4 + $0x8] sm:$0xf]
      %v1620 = vld [vmem:[%s4 + $0xc] sm:$0xf]
      %v1621 = vld [vmem:[%s4 + $0x10] sm:$0xf]
      %v1622 = vld [vmem:[%s4 + $0x14] sm:$0xf]
      %v1623 = vld [vmem:[%s4 + $0x18] sm:$0xf]
      %v1624 = vld [vmem:[%s4 + $0x1c] sm:$0xf]
      %v1625 = vld [vmem:[%s4 + $0x20] sm:$0xf]
      %v1626 = vld [vmem:[%s4 + $0x24] sm:$0xf]
      %v1627 = vld [vmem:[%s4 + $0x28] sm:$0xf]
      %v1628 = vld [vmem:[%s4 + $0x2c] sm:$0xf]
      %v1629 = vld [vmem:[%s4 + $0x30] sm:$0xf]
      %v1630 = vld [vmem:[%s4 + $0x34] sm:$0xf]
      %v1631 = vld [vmem:[%s4 + $0x38] sm:$0xf]
      %v1632 = vld [vmem:[%s4 + $0x3c] sm:$0xf]
      %v1633 = vld [vmem:[%s4 + $0x40] sm:$0xf]
      %v1634 = vld [vmem:[%s4 + $0x44] sm:$0xf]
      %v1635 = vld [vmem:[%s4 + $0x48] sm:$0xf]
      %v1636 = vld [vmem:[%s4 + $0x4c] sm:$0xf]
      %v1637 = vld [vmem:[%s4 + $0x50] sm:$0xf]
      %v1638 = vld [vmem:[%s4 + $0x54] sm:$0xf]
      %v1639 = vld [vmem:[%s4 + $0x58] sm:$0xf]
      %v1640 = vld [vmem:[%s4 + $0x5c] sm:$0xf]
      %v1641 = vld [vmem:[%s4 + $0x60] sm:$0xf]
      %v1642 = vld [vmem:[%s4 + $0x64] sm:$0xf]
      %v1643 = vld [vmem:[%s4 + $0x68] sm:$0xf]
      %v1644 = vld [vmem:[%s4 + $0x6c] sm:$0xf]
      %v1645 = vld [vmem:[%s4 + $0x70] sm:$0xf]
      %v1646 = vld [vmem:[%s4 + $0x74] sm:$0xf]
      %v1647 = vld [vmem:[%s4 + $0x78] sm:$0xf]
      %v1648 = vld [vmem:[%s4 + $0x7c] sm:$0xf]
      %v1649 = vld [vmem:[#allocation4] sm:$0xfe]
      %v1650 = vld [vmem:[#allocation4 + $0x8] sm:$0xfe]
      %v1651 = vld [vmem:[#allocation4 + $0x10] sm:$0x1]
      %v1652 = vld [vmem:[#allocation4 + $0x18] sm:$0x1]
      %v1653 = vpack.c.bf16 %v1651, %v1649
      %v1654 = vpack.c.bf16 %v1652, %v1650
      %s1655 = scalar_lea.vmem %s4, 128
      %v1656 = vld [vmem:[%s1655] sm:$0xf]
      %v1657 = vld [vmem:[%s1655 + $0x4] sm:$0xf]
      %v1658 = vld [vmem:[%s1655 + $0x8] sm:$0xf]
      %v1659 = vld [vmem:[%s1655 + $0xc] sm:$0xf]
      %v1660 = vld [vmem:[%s1655 + $0x10] sm:$0xf]
      %v1661 = vld [vmem:[%s1655 + $0x14] sm:$0xf]
      %v1662 = vld [vmem:[%s1655 + $0x18] sm:$0xf]
      %v1663 = vld [vmem:[%s1655 + $0x1c] sm:$0xf]
      %v1664 = vld [vmem:[%s1655 + $0x20] sm:$0xf]
      %v1665 = vld [vmem:[%s1655 + $0x24] sm:$0xf]
      %v1666 = vld [vmem:[%s1655 + $0x28] sm:$0xf]
      %v1667 = vld [vmem:[%s1655 + $0x2c] sm:$0xf]
      %v1668 = vld [vmem:[%s1655 + $0x30] sm:$0xf]
      %v1669 = vld [vmem:[%s1655 + $0x34] sm:$0xf]
      %v1670 = vld [vmem:[%s1655 + $0x38] sm:$0xf]
      %v1671 = vld [vmem:[%s1655 + $0x3c] sm:$0xf]
      %v1672 = vld [vmem:[%s1655 + $0x40] sm:$0xf]
      %v1673 = vld [vmem:[%s1655 + $0x44] sm:$0xf]
      %v1674 = vld [vmem:[%s1655 + $0x48] sm:$0xf]
      %v1675 = vld [vmem:[%s1655 + $0x4c] sm:$0xf]
      %v1676 = vld [vmem:[%s1655 + $0x50] sm:$0xf]
      %v1677 = vld [vmem:[%s1655 + $0x54] sm:$0xf]
      %v1678 = vld [vmem:[%s1655 + $0x58] sm:$0xf]
      %v1679 = vld [vmem:[%s1655 + $0x5c] sm:$0xf]
      %v1680 = vld [vmem:[%s1655 + $0x60] sm:$0xf]
      %v1681 = vld [vmem:[%s1655 + $0x64] sm:$0xf]
      %v1682 = vld [vmem:[%s1655 + $0x68] sm:$0xf]
      %v1683 = vld [vmem:[%s1655 + $0x6c] sm:$0xf]
      %v1684 = vld [vmem:[%s1655 + $0x70] sm:$0xf]
      %v1685 = vld [vmem:[%s1655 + $0x74] sm:$0xf]
      %v1686 = vld [vmem:[%s1655 + $0x78] sm:$0xf]
      %v1687 = vld [vmem:[%s1655 + $0x7c] sm:$0xf]
      %v1689 = vshrl.u32 %v1653, 16
      %v1691 = vshll.u32 %v1653, 16
      %v1693 = vrot.slane %v1691, 1
      %v1694 = vor.u32 %v1689, %v1693
      %v1696 = vshrl.u32 %v1654, 16
      %v1698 = vshll.u32 %v1654, 16
      %v1700 = vrot.slane %v1698, 1
      %v1701 = vor.u32 %v1696, %v1700
      %v1736 = vunpack.c.l.b16 %v1656
      %v1737 = vunpack.c.l.b16 %v1657
      %v1738 = vunpack.c.l.b16 %v1658
      %v1739 = vunpack.c.l.b16 %v1659
      %v1740 = vunpack.c.l.b16 %v1660
      %v1741 = vunpack.c.l.b16 %v1661
      %v1742 = vunpack.c.l.b16 %v1662
      %v1743 = vunpack.c.l.b16 %v1663
      %v1744 = vunpack.c.l.b16 %v1664
      %v1745 = vunpack.c.l.b16 %v1665
      %v1746 = vunpack.c.l.b16 %v1666
      %v1747 = vunpack.c.l.b16 %v1667
      %v1748 = vunpack.c.l.b16 %v1668
      %v1749 = vunpack.c.l.b16 %v1669
      %v1750 = vunpack.c.l.b16 %v1670
      %v1751 = vunpack.c.l.b16 %v1671
      %v1752 = vunpack.c.l.b16 %v1672
      %v1753 = vunpack.c.l.b16 %v1673
      %v1754 = vunpack.c.l.b16 %v1674
      %v1755 = vunpack.c.l.b16 %v1675
      %v1756 = vunpack.c.l.b16 %v1676
      %v1757 = vunpack.c.l.b16 %v1677
      %v1758 = vunpack.c.l.b16 %v1678
      %v1759 = vunpack.c.l.b16 %v1679
      %v1760 = vunpack.c.l.b16 %v1680
      %v1761 = vunpack.c.l.b16 %v1681
      %v1762 = vunpack.c.l.b16 %v1682
      %v1763 = vunpack.c.l.b16 %v1683
      %v1764 = vunpack.c.l.b16 %v1684
      %v1765 = vunpack.c.l.b16 %v1685
      %v1766 = vunpack.c.l.b16 %v1686
      %v1767 = vunpack.c.l.b16 %v1687
      %v1768 = vpack.c.b16 %v1737, %v1736
      %v1769 = vpack.c.b16 %v1739, %v1738
      %v1770 = vpack.c.b16 %v1741, %v1740
      %v1771 = vpack.c.b16 %v1743, %v1742
      %v1772 = vpack.c.b16 %v1745, %v1744
      %v1773 = vpack.c.b16 %v1747, %v1746
      %v1774 = vpack.c.b16 %v1749, %v1748
      %v1775 = vpack.c.b16 %v1751, %v1750
      %v1776 = vpack.c.b16 %v1753, %v1752
      %v1777 = vpack.c.b16 %v1755, %v1754
      %v1778 = vpack.c.b16 %v1757, %v1756
      %v1779 = vpack.c.b16 %v1759, %v1758
      %v1780 = vpack.c.b16 %v1761, %v1760
      %v1781 = vpack.c.b16 %v1763, %v1762
      %v1782 = vpack.c.b16 %v1765, %v1764
      %v1783 = vpack.c.b16 %v1767, %v1766
      %1800 = vmatpush.bf16.msra.mxu0 %v1775
      %1801 = vmatpush.bf16.msra.mxu0 %v1774
      %1802 = vmatpush.bf16.msra.mxu0 %v1773
      %1803 = vmatpush.bf16.msra.mxu0 %v1772
      %1804 = vmatpush.bf16.msra.mxu0 %v1771
      %1805 = vmatpush.bf16.msra.mxu0 %v1770
      %1806 = vmatpush.bf16.msra.mxu0 %v1769
      %1807 = vmatpush.bf16.msra.mxu0 %v1768
      %1808 = vmatmul.bf16.gmra.mxu0 %v1694
      %v1809 = vpop.f32.mrf.mxu0
      %v1810 = vadd.f32 0.0, %v1809
      %v1811 = vpop.f32.mrf.mxu0
      %1812 = vdwg.mxu0
      %1813 = vmatpush.bf16.msra.mxu0 %v1783
      %1814 = vmatpush.bf16.msra.mxu0 %v1782
      %1815 = vmatpush.bf16.msra.mxu0 %v1781
      %1816 = vmatpush.bf16.msra.mxu0 %v1780
      %1817 = vmatpush.bf16.msra.mxu0 %v1779
      %1818 = vmatpush.bf16.msra.mxu0 %v1778
      %1819 = vmatpush.bf16.msra.mxu0 %v1777
      %1820 = vmatpush.bf16.msra.mxu0 %v1776
      %1821 = vmatmul.bf16.gmra.mxu0 %v1701
      %v1822 = vpop.f32.mrf.mxu0
      %v1823 = vadd.f32 %v1810, %v1822
      %v1824 = vpop.f32.mrf.mxu0
      %1825 = vdwg.mxu0
      %v1858 = vunpack.c.l.b16 %v1617
      %v1859 = vunpack.c.l.b16 %v1618
      %v1860 = vunpack.c.l.b16 %v1619
      %v1861 = vunpack.c.l.b16 %v1620
      %v1862 = vunpack.c.l.b16 %v1621
      %v1863 = vunpack.c.l.b16 %v1622
      %v1864 = vunpack.c.l.b16 %v1623
      %v1865 = vunpack.c.l.b16 %v1624
      %v1866 = vunpack.c.l.b16 %v1625
      %v1867 = vunpack.c.l.b16 %v1626
      %v1868 = vunpack.c.l.b16 %v1627
      %v1869 = vunpack.c.l.b16 %v1628
      %v1870 = vunpack.c.l.b16 %v1629
      %v1871 = vunpack.c.l.b16 %v1630
      %v1872 = vunpack.c.l.b16 %v1631
      %v1873 = vunpack.c.l.b16 %v1632
      %v1874 = vunpack.c.l.b16 %v1633
      %v1875 = vunpack.c.l.b16 %v1634
      %v1876 = vunpack.c.l.b16 %v1635
      %v1877 = vunpack.c.l.b16 %v1636
      %v1878 = vunpack.c.l.b16 %v1637
      %v1879 = vunpack.c.l.b16 %v1638
      %v1880 = vunpack.c.l.b16 %v1639
      %v1881 = vunpack.c.l.b16 %v1640
      %v1882 = vunpack.c.l.b16 %v1641
      %v1883 = vunpack.c.l.b16 %v1642
      %v1884 = vunpack.c.l.b16 %v1643
      %v1885 = vunpack.c.l.b16 %v1644
      %v1886 = vunpack.c.l.b16 %v1645
      %v1887 = vunpack.c.l.b16 %v1646
      %v1888 = vunpack.c.l.b16 %v1647
      %v1889 = vunpack.c.l.b16 %v1648
      %v1890 = vpack.c.b16 %v1859, %v1858
      %v1891 = vpack.c.b16 %v1861, %v1860
      %v1892 = vpack.c.b16 %v1863, %v1862
      %v1893 = vpack.c.b16 %v1865, %v1864
      %v1894 = vpack.c.b16 %v1867, %v1866
      %v1895 = vpack.c.b16 %v1869, %v1868
      %v1896 = vpack.c.b16 %v1871, %v1870
      %v1897 = vpack.c.b16 %v1873, %v1872
      %v1898 = vpack.c.b16 %v1875, %v1874
      %v1899 = vpack.c.b16 %v1877, %v1876
      %v1900 = vpack.c.b16 %v1879, %v1878
      %v1901 = vpack.c.b16 %v1881, %v1880
      %v1902 = vpack.c.b16 %v1883, %v1882
      %v1903 = vpack.c.b16 %v1885, %v1884
      %v1904 = vpack.c.b16 %v1887, %v1886
      %v1905 = vpack.c.b16 %v1889, %v1888
      %1922 = vmatpush.bf16.msra.mxu0 %v1897
      %1923 = vmatpush.bf16.msra.mxu0 %v1896
      %1924 = vmatpush.bf16.msra.mxu0 %v1895
      %1925 = vmatpush.bf16.msra.mxu0 %v1894
      %1926 = vmatpush.bf16.msra.mxu0 %v1893
      %1927 = vmatpush.bf16.msra.mxu0 %v1892
      %1928 = vmatpush.bf16.msra.mxu0 %v1891
      %1929 = vmatpush.bf16.msra.mxu0 %v1890
      %1930 = vmatmul.bf16.gmra.mxu0 %v1615
      %v1931 = vpop.f32.mrf.mxu0
      %v1932 = vadd.f32 %v1823, %v1931
      %v1933 = vpop.f32.mrf.mxu0
      %1934 = vdwg.mxu0
      %1935 = vmatpush.bf16.msra.mxu0 %v1905
      %1936 = vmatpush.bf16.msra.mxu0 %v1904
      %1937 = vmatpush.bf16.msra.mxu0 %v1903
      %1938 = vmatpush.bf16.msra.mxu0 %v1902
      %1939 = vmatpush.bf16.msra.mxu0 %v1901
      %1940 = vmatpush.bf16.msra.mxu0 %v1900
      %1941 = vmatpush.bf16.msra.mxu0 %v1899
      %1942 = vmatpush.bf16.msra.mxu0 %v1898
      %1943 = vmatmul.bf16.gmra.mxu0 %v1616
      %v1944 = vpop.f32.mrf.mxu0
      %v1945 = vadd.f32 %v1932, %v1944
      %v1946 = vpop.f32.mrf.mxu0
      %1947 = vdwg.mxu0
      %v1948 = vld [vmem:[#allocation4] sm:$0xfc]
      %v1949 = vld [vmem:[#allocation4 + $0x8] sm:$0xfc]
      %v1950 = vld [vmem:[#allocation4 + $0x10] sm:$0x3]
      %v1951 = vld [vmem:[#allocation4 + $0x18] sm:$0x3]
      %v1952 = vpack.c.bf16 %v1950, %v1948
      %v1953 = vpack.c.bf16 %v1951, %v1949
      %s1954 = scalar_lea.vmem %s4, 256
      %v1955 = vld [vmem:[%s1954] sm:$0xf]
      %v1956 = vld [vmem:[%s1954 + $0x4] sm:$0xf]
      %v1957 = vld [vmem:[%s1954 + $0x8] sm:$0xf]
      %v1958 = vld [vmem:[%s1954 + $0xc] sm:$0xf]
      %v1959 = vld [vmem:[%s1954 + $0x10] sm:$0xf]
      %v1960 = vld [vmem:[%s1954 + $0x14] sm:$0xf]
      %v1961 = vld [vmem:[%s1954 + $0x18] sm:$0xf]
      %v1962 = vld [vmem:[%s1954 + $0x1c] sm:$0xf]
      %v1963 = vld [vmem:[%s1954 + $0x20] sm:$0xf]
      %v1964 = vld [vmem:[%s1954 + $0x24] sm:$0xf]
      %v1965 = vld [vmem:[%s1954 + $0x28] sm:$0xf]
      %v1966 = vld [vmem:[%s1954 + $0x2c] sm:$0xf]
      %v1967 = vld [vmem:[%s1954 + $0x30] sm:$0xf]
      %v1968 = vld [vmem:[%s1954 + $0x34] sm:$0xf]
      %v1969 = vld [vmem:[%s1954 + $0x38] sm:$0xf]
      %v1970 = vld [vmem:[%s1954 + $0x3c] sm:$0xf]
      %v1971 = vld [vmem:[%s1954 + $0x40] sm:$0xf]
      %v1972 = vld [vmem:[%s1954 + $0x44] sm:$0xf]
      %v1973 = vld [vmem:[%s1954 + $0x48] sm:$0xf]
      %v1974 = vld [vmem:[%s1954 + $0x4c] sm:$0xf]
      %v1975 = vld [vmem:[%s1954 + $0x50] sm:$0xf]
      %v1976 = vld [vmem:[%s1954 + $0x54] sm:$0xf]
      %v1977 = vld [vmem:[%s1954 + $0x58] sm:$0xf]
      %v1978 = vld [vmem:[%s1954 + $0x5c] sm:$0xf]
      %v1979 = vld [vmem:[%s1954 + $0x60] sm:$0xf]
      %v1980 = vld [vmem:[%s1954 + $0x64] sm:$0xf]
      %v1981 = vld [vmem:[%s1954 + $0x68] sm:$0xf]
      %v1982 = vld [vmem:[%s1954 + $0x6c] sm:$0xf]
      %v1983 = vld [vmem:[%s1954 + $0x70] sm:$0xf]
      %v1984 = vld [vmem:[%s1954 + $0x74] sm:$0xf]
      %v1985 = vld [vmem:[%s1954 + $0x78] sm:$0xf]
      %v1986 = vld [vmem:[%s1954 + $0x7c] sm:$0xf]
      %v1989 = vrot.slane %v1952, 1
      %v1990 = vrot.slane %v1953, 1
      %v2025 = vunpack.c.l.b16 %v1955
      %v2026 = vunpack.c.l.b16 %v1956
      %v2027 = vunpack.c.l.b16 %v1957
      %v2028 = vunpack.c.l.b16 %v1958
      %v2029 = vunpack.c.l.b16 %v1959
      %v2030 = vunpack.c.l.b16 %v1960
      %v2031 = vunpack.c.l.b16 %v1961
      %v2032 = vunpack.c.l.b16 %v1962
      %v2033 = vunpack.c.l.b16 %v1963
      %v2034 = vunpack.c.l.b16 %v1964
      %v2035 = vunpack.c.l.b16 %v1965
      %v2036 = vunpack.c.l.b16 %v1966
      %v2037 = vunpack.c.l.b16 %v1967
      %v2038 = vunpack.c.l.b16 %v1968
      %v2039 = vunpack.c.l.b16 %v1969
      %v2040 = vunpack.c.l.b16 %v1970
      %v2041 = vunpack.c.l.b16 %v1971
      %v2042 = vunpack.c.l.b16 %v1972
      %v2043 = vunpack.c.l.b16 %v1973
      %v2044 = vunpack.c.l.b16 %v1974
      %v2045 = vunpack.c.l.b16 %v1975
      %v2046 = vunpack.c.l.b16 %v1976
      %v2047 = vunpack.c.l.b16 %v1977
      %v2048 = vunpack.c.l.b16 %v1978
      %v2049 = vunpack.c.l.b16 %v1979
      %v2050 = vunpack.c.l.b16 %v1980
      %v2051 = vunpack.c.l.b16 %v1981
      %v2052 = vunpack.c.l.b16 %v1982
      %v2053 = vunpack.c.l.b16 %v1983
      %v2054 = vunpack.c.l.b16 %v1984
      %v2055 = vunpack.c.l.b16 %v1985
      %v2056 = vunpack.c.l.b16 %v1986
      %v2057 = vpack.c.b16 %v2026, %v2025
      %v2058 = vpack.c.b16 %v2028, %v2027
      %v2059 = vpack.c.b16 %v2030, %v2029
      %v2060 = vpack.c.b16 %v2032, %v2031
      %v2061 = vpack.c.b16 %v2034, %v2033
      %v2062 = vpack.c.b16 %v2036, %v2035
      %v2063 = vpack.c.b16 %v2038, %v2037
      %v2064 = vpack.c.b16 %v2040, %v2039
      %v2065 = vpack.c.b16 %v2042, %v2041
      %v2066 = vpack.c.b16 %v2044, %v2043
      %v2067 = vpack.c.b16 %v2046, %v2045
      %v2068 = vpack.c.b16 %v2048, %v2047
      %v2069 = vpack.c.b16 %v2050, %v2049
      %v2070 = vpack.c.b16 %v2052, %v2051
      %v2071 = vpack.c.b16 %v2054, %v2053
      %v2072 = vpack.c.b16 %v2056, %v2055
      %2089 = vmatpush.bf16.msra.mxu0 %v2064
      %2090 = vmatpush.bf16.msra.mxu0 %v2063
      %2091 = vmatpush.bf16.msra.mxu0 %v2062
      %2092 = vmatpush.bf16.msra.mxu0 %v2061
      %2093 = vmatpush.bf16.msra.mxu0 %v2060
      %2094 = vmatpush.bf16.msra.mxu0 %v2059
      %2095 = vmatpush.bf16.msra.mxu0 %v2058
      %2096 = vmatpush.bf16.msra.mxu0 %v2057
      %2097 = vmatmul.bf16.gmra.mxu0 %v1989
      %v2098 = vpop.f32.mrf.mxu0
      %v2099 = vadd.f32 0.0, %v2098
      %v2100 = vpop.f32.mrf.mxu0
      %2101 = vdwg.mxu0
      %2102 = vmatpush.bf16.msra.mxu0 %v2072
      %2103 = vmatpush.bf16.msra.mxu0 %v2071
      %2104 = vmatpush.bf16.msra.mxu0 %v2070
      %2105 = vmatpush.bf16.msra.mxu0 %v2069
      %2106 = vmatpush.bf16.msra.mxu0 %v2068
      %2107 = vmatpush.bf16.msra.mxu0 %v2067
      %2108 = vmatpush.bf16.msra.mxu0 %v2066
      %2109 = vmatpush.bf16.msra.mxu0 %v2065
      %2110 = vmatmul.bf16.gmra.mxu0 %v1990
      %v2111 = vpop.f32.mrf.mxu0
      %v2112 = vadd.f32 %v2099, %v2111
      %v2113 = vpop.f32.mrf.mxu0
      %2114 = vdwg.mxu0
      %v2115 = vadd.f32 %v1945, %v2112
      %v2116 = vld [vmem:[#allocation4] sm:$0xf8]
      %v2117 = vld [vmem:[#allocation4 + $0x8] sm:$0xf8]
      %v2118 = vld [vmem:[#allocation4 + $0x10] sm:$0x7]
      %v2119 = vld [vmem:[#allocation4 + $0x18] sm:$0x7]
      %v2120 = vpack.c.bf16 %v2118, %v2116
      %v2121 = vpack.c.bf16 %v2119, %v2117
      %s2122 = scalar_lea.vmem %s4, 384
      %v2123 = vld [vmem:[%s2122] sm:$0xf]
      %v2124 = vld [vmem:[%s2122 + $0x4] sm:$0xf]
      %v2125 = vld [vmem:[%s2122 + $0x8] sm:$0xf]
      %v2126 = vld [vmem:[%s2122 + $0xc] sm:$0xf]
      %v2127 = vld [vmem:[%s2122 + $0x10] sm:$0xf]
      %v2128 = vld [vmem:[%s2122 + $0x14] sm:$0xf]
      %v2129 = vld [vmem:[%s2122 + $0x18] sm:$0xf]
      %v2130 = vld [vmem:[%s2122 + $0x1c] sm:$0xf]
      %v2131 = vld [vmem:[%s2122 + $0x20] sm:$0xf]
      %v2132 = vld [vmem:[%s2122 + $0x24] sm:$0xf]
      %v2133 = vld [vmem:[%s2122 + $0x28] sm:$0xf]
      %v2134 = vld [vmem:[%s2122 + $0x2c] sm:$0xf]
      %v2135 = vld [vmem:[%s2122 + $0x30] sm:$0xf]
      %v2136 = vld [vmem:[%s2122 + $0x34] sm:$0xf]
      %v2137 = vld [vmem:[%s2122 + $0x38] sm:$0xf]
      %v2138 = vld [vmem:[%s2122 + $0x3c] sm:$0xf]
      %v2139 = vld [vmem:[%s2122 + $0x40] sm:$0xf]
      %v2140 = vld [vmem:[%s2122 + $0x44] sm:$0xf]
      %v2141 = vld [vmem:[%s2122 + $0x48] sm:$0xf]
      %v2142 = vld [vmem:[%s2122 + $0x4c] sm:$0xf]
      %v2143 = vld [vmem:[%s2122 + $0x50] sm:$0xf]
      %v2144 = vld [vmem:[%s2122 + $0x54] sm:$0xf]
      %v2145 = vld [vmem:[%s2122 + $0x58] sm:$0xf]
      %v2146 = vld [vmem:[%s2122 + $0x5c] sm:$0xf]
      %v2147 = vld [vmem:[%s2122 + $0x60] sm:$0xf]
      %v2148 = vld [vmem:[%s2122 + $0x64] sm:$0xf]
      %v2149 = vld [vmem:[%s2122 + $0x68] sm:$0xf]
      %v2150 = vld [vmem:[%s2122 + $0x6c] sm:$0xf]
      %v2151 = vld [vmem:[%s2122 + $0x70] sm:$0xf]
      %v2152 = vld [vmem:[%s2122 + $0x74] sm:$0xf]
      %v2153 = vld [vmem:[%s2122 + $0x78] sm:$0xf]
      %v2154 = vld [vmem:[%s2122 + $0x7c] sm:$0xf]
      %v2156 = vshrl.u32 %v2120, 16
      %v2158 = vrot.slane %v2156, 1
      %v2159 = vshll.u32 %v2120, 16
      %v2161 = vrot.slane %v2159, 2
      %v2162 = vor.u32 %v2158, %v2161
      %v2164 = vshrl.u32 %v2121, 16
      %v2166 = vrot.slane %v2164, 1
      %v2167 = vshll.u32 %v2121, 16
      %v2169 = vrot.slane %v2167, 2
      %v2170 = vor.u32 %v2166, %v2169
      %v2205 = vunpack.c.l.b16 %v2123
      %v2206 = vunpack.c.l.b16 %v2124
      %v2207 = vunpack.c.l.b16 %v2125
      %v2208 = vunpack.c.l.b16 %v2126
      %v2209 = vunpack.c.l.b16 %v2127
      %v2210 = vunpack.c.l.b16 %v2128
      %v2211 = vunpack.c.l.b16 %v2129
      %v2212 = vunpack.c.l.b16 %v2130
      %v2213 = vunpack.c.l.b16 %v2131
      %v2214 = vunpack.c.l.b16 %v2132
      %v2215 = vunpack.c.l.b16 %v2133
      %v2216 = vunpack.c.l.b16 %v2134
      %v2217 = vunpack.c.l.b16 %v2135
      %v2218 = vunpack.c.l.b16 %v2136
      %v2219 = vunpack.c.l.b16 %v2137
      %v2220 = vunpack.c.l.b16 %v2138
      %v2221 = vunpack.c.l.b16 %v2139
      %v2222 = vunpack.c.l.b16 %v2140
      %v2223 = vunpack.c.l.b16 %v2141
      %v2224 = vunpack.c.l.b16 %v2142
      %v2225 = vunpack.c.l.b16 %v2143
      %v2226 = vunpack.c.l.b16 %v2144
      %v2227 = vunpack.c.l.b16 %v2145
      %v2228 = vunpack.c.l.b16 %v2146
      %v2229 = vunpack.c.l.b16 %v2147
      %v2230 = vunpack.c.l.b16 %v2148
      %v2231 = vunpack.c.l.b16 %v2149
      %v2232 = vunpack.c.l.b16 %v2150
      %v2233 = vunpack.c.l.b16 %v2151
      %v2234 = vunpack.c.l.b16 %v2152
      %v2235 = vunpack.c.l.b16 %v2153
      %v2236 = vunpack.c.l.b16 %v2154
      %v2237 = vpack.c.b16 %v2206, %v2205
      %v2238 = vpack.c.b16 %v2208, %v2207
      %v2239 = vpack.c.b16 %v2210, %v2209
      %v2240 = vpack.c.b16 %v2212, %v2211
      %v2241 = vpack.c.b16 %v2214, %v2213
      %v2242 = vpack.c.b16 %v2216, %v2215
      %v2243 = vpack.c.b16 %v2218, %v2217
      %v2244 = vpack.c.b16 %v2220, %v2219
      %v2245 = vpack.c.b16 %v2222, %v2221
      %v2246 = vpack.c.b16 %v2224, %v2223
      %v2247 = vpack.c.b16 %v2226, %v2225
      %v2248 = vpack.c.b16 %v2228, %v2227
      %v2249 = vpack.c.b16 %v2230, %v2229
      %v2250 = vpack.c.b16 %v2232, %v2231
      %v2251 = vpack.c.b16 %v2234, %v2233
      %v2252 = vpack.c.b16 %v2236, %v2235
      %2269 = vmatpush.bf16.msra.mxu0 %v2244
      %2270 = vmatpush.bf16.msra.mxu0 %v2243
      %2271 = vmatpush.bf16.msra.mxu0 %v2242
      %2272 = vmatpush.bf16.msra.mxu0 %v2241
      %2273 = vmatpush.bf16.msra.mxu0 %v2240
      %2274 = vmatpush.bf16.msra.mxu0 %v2239
      %2275 = vmatpush.bf16.msra.mxu0 %v2238
      %2276 = vmatpush.bf16.msra.mxu0 %v2237
      %2277 = vmatmul.bf16.gmra.mxu0 %v2162
      %v2278 = vpop.f32.mrf.mxu0
      %v2279 = vadd.f32 0.0, %v2278
      %v2280 = vpop.f32.mrf.mxu0
      %2281 = vdwg.mxu0
      %2282 = vmatpush.bf16.msra.mxu0 %v2252
      %2283 = vmatpush.bf16.msra.mxu0 %v2251
      %2284 = vmatpush.bf16.msra.mxu0 %v2250
      %2285 = vmatpush.bf16.msra.mxu0 %v2249
      %2286 = vmatpush.bf16.msra.mxu0 %v2248
      %2287 = vmatpush.bf16.msra.mxu0 %v2247
      %2288 = vmatpush.bf16.msra.mxu0 %v2246
      %2289 = vmatpush.bf16.msra.mxu0 %v2245
      %2290 = vmatmul.bf16.gmra.mxu0 %v2170
      %v2291 = vpop.f32.mrf.mxu0
      %v2292 = vadd.f32 %v2279, %v2291
      %v2293 = vpop.f32.mrf.mxu0
      %2294 = vdwg.mxu0
      %v2295 = vadd.f32 %v2115, %v2292
      %v2296 = vld [vmem:[%s8] sm:$0x1]
      %v2298 = vperm.slane %v2296, 0
      %v2300 = vadd.f32 %v2295, %v2298
      %2301 = vst [vmem:[%s330] sm:$0xff] %v2300
      %p2302 = scmp.lt.s32.totalorder %s20, 1
      %s2303 = scalar_select %p2302, %s20, 1
      %s2304 = smul.addr %s2303, 8
      %s2305 = scalar_lea.vmem %s9, %s2304
      // Predicated region
      $region57: #{discriminator_forward.1} parent=55 // pred_check
        %p2306 = pneg %p232
      $region58: #{discriminator_forward.1} parent=55 // pred_check_branch
        %2308 = sbr.rel (%p2306) target = $region60
      $region59: #{discriminator_forward.1} parent=55 // pred_region
        _
      $region60: #{discriminator_forward.1} parent=55 // pred_fallthru
        _
    $region56: #{discriminator_forward.1} parent=5 // pred_fallthru
      _
    %p2309 = scmp.le.s32.totalorder 2, %s15
    // Predicated region
    $region61: #{discriminator_forward.1} parent=5 // pred_check
      %p2310 = pneg %p2309
    $region62: #{discriminator_forward.1} parent=5 // pred_check_branch
      %2312 = sbr.rel (%p2310) target = $region64
    $region63: #{discriminator_forward.1} parent=5 // pred_region
      %s2313 = ssub.s32 %s15, 2
      // Predicated region
      $region65: #{discriminator_forward.1} parent=63 // pred_check
        %p2314 = pneg %p238
      $region66: #{discriminator_forward.1} parent=63 // pred_check_branch
        %2316 = sbr.rel (%p2314) target = $region68
      $region67: #{discriminator_forward.1} parent=63 // pred_region
        %p2317 = scmp.lt.s32.totalorder %s21, 1
        %s2318 = scalar_select %p2317, %s21, 1
        %s2319 = smul.addr %s2318, 8
        %s2320 = scalar_lea.vmem %s9, %s2319
      $region68: #{discriminator_forward.1} parent=63 // pred_fallthru
        _
    $region64: #{discriminator_forward.1} parent=5 // pred_fallthru
      _
  $region6: #{discriminator_forward.1} parent=0 // loop_footer
    %s19 = sadd.s32 1, %s15
  $region7: #{discriminator_forward.1} parent=0 // loop_footer_branch
    %14 = sbr.rel target = $region3
  $region8: #{discriminator_forward.1} parent=0 // loop_exit
    _

</llo_original>
